<compile_context>
chip_gen: v6e
topology: v6e:2x2x1
jax: 0.10.0
libtpu: 0.0.40
codegen_flags: <defaults>
</compile_context>

<pallas_src>
import functools

import jax
import jax.numpy as jnp
from jax.experimental import pallas as pl
from jax.experimental.pallas import tpu as pltpu


def _residual_block_kernel(x_ref, w1_ref, b1_ref, w2_ref, b2_ref, out_ref,
                           *, H, W):
    """x_ref/out_ref: (1, P, H*W); w*_ref: (9, P, P); b*_ref: (P, 1).

    P = Nb*C packed rows (Nb images x C channels).  Weights are block-diagonal
    per tap, so channel mixing stays within each image.
    """
    HW = H * W
    x = x_ref[0]                                    # (P, HW), lanes = flat spatial
    P = x.shape[0]

    # --- Border masks (emulate zero padding), hoisted & broadcast once. -----
    idx = jax.lax.broadcasted_iota(jnp.int32, (1, HW), 1)
    col = idx % W
    not_top = idx >= W                 # valid for taps with dh == 0
    not_bot = idx < (H - 1) * W        # valid for taps with dh == 2
    not_left = col >= 1                # valid for taps with dw == 0
    not_right = col <= W - 2           # valid for taps with dw == 2

    masks = {}
    for dh in range(3):
        for dw in range(3):
            m = None
            if dh == 0:
                m = not_top
            elif dh == 2:
                m = not_bot
            if dw == 0:
                m = not_left if m is None else jnp.logical_and(m, not_left)
            elif dw == 2:
                m = not_right if m is None else jnp.logical_and(m, not_right)
            if m is not None:
                masks[(dh, dw)] = jnp.broadcast_to(m, (P, HW))

    def conv3x3(v, w_ref, b_ref):
        w = w_ref[...]                               # one bulk load: (9, P, P)
        b = b_ref[...]                               # (P, 1), bcast over lanes
        # Center tap (dh=1, dw=1, shift 0, no mask) seeds the accumulator.
        acc = jnp.dot(w[4], v, preferred_element_type=jnp.float32) + b
        for dh in range(3):
            for dw in range(3):
                k = dh * 3 + dw
                if k == 4:
                    continue
                # Tap (dh, dw) reads v_flat[i + shift] for output position i.
                shift = (dh - 1) * W + (dw - 1)
                patch = pltpu.roll(v, (-shift) % HW, 1)   # XLU lane rotate
                patch = jnp.where(masks[(dh, dw)], patch, 0.0)
                acc = acc + jnp.dot(w[k], patch,
                                    preferred_element_type=jnp.float32)
        return acc

    y = conv3x3(x, w1_ref, b1_ref)
    y = jnp.maximum(y, 0.0)                               # ReLU
    y = conv3x3(y, w2_ref, b2_ref)
    out_ref[0] = (y + x).astype(out_ref.dtype)            # residual add


@jax.jit
def residual_block(x_nchw, w1, b1, w2, b2):
    """x_nchw: (N, C, H, W) f32; w*: (C, C, 3, 3); b*: (C,). Returns NCHW."""
    N, C, H, W = x_nchw.shape
    HW = H * W

    # Pack Nb images per block so Nb*C fills the 8 f32 sublanes of a vreg.
    # (On v7x with larger N the resulting grid still has >=2 parallel steps;
    #  at N=2 this collapses the grid to a single step, the right call on
    #  single-TensorCore v5e/v6e where the kernel is per-step-overhead bound.)
    Nb = max(1, 8 // C)
    Nb = min(Nb, max(N, 1))
    G = -(-N // Nb)                    # number of grid steps
    pad = G * Nb - N
    P = Nb * C

    x_flat = x_nchw.reshape(N, C, HW)                 # free reshape
    if pad:
        x_flat = jnp.concatenate(
            [x_flat, jnp.zeros((pad, C, HW), x_flat.dtype)], axis=0)
    x_packed = x_flat.reshape(G, P, HW)               # free reshape (HBM)

    def to_taps_blockdiag(w):                         # (Cout,Cin,3,3) -> (9,P,P)
        taps = jnp.transpose(w, (2, 3, 0, 1)).reshape(9, C, C)
        eye = jnp.eye(Nb, dtype=w.dtype)
        # W_bd[k, i*C+a, j*C+b] = taps[k, a, b] * delta(i, j)
        return jnp.einsum('kab,ij->kiajb', taps, eye).reshape(9, P, P)

    w1t, w2t = to_taps_blockdiag(w1), to_taps_blockdiag(w2)
    b1p = jnp.tile(b1, Nb).reshape(P, 1)
    b2p = jnp.tile(b2, Nb).reshape(P, 1)

    kernel = functools.partial(_residual_block_kernel, H=H, W=W)

    out = pl.pallas_call(
        kernel,
        out_shape=jax.ShapeDtypeStruct((G, P, HW), jnp.float32),
        grid_spec=pltpu.PrefetchScalarGridSpec(
            num_scalar_prefetch=0,
            grid=(G,),
            in_specs=[
                pl.BlockSpec((1, P, HW), lambda g: (g, 0, 0)),
                pl.BlockSpec((9, P, P), lambda g: (0, 0, 0)),
                pl.BlockSpec((P, 1), lambda g: (0, 0)),
                pl.BlockSpec((9, P, P), lambda g: (0, 0, 0)),
                pl.BlockSpec((P, 1), lambda g: (0, 0)),
            ],
            out_specs=pl.BlockSpec((1, P, HW), lambda g: (g, 0, 0)),
        ),
        compiler_params=pltpu.CompilerParams(
            dimension_semantics=("parallel",)),
    )(x_packed, w1t, b1p, w2t, b2p)

    out = out.reshape(G * Nb, C, HW)[:N]              # drop batch padding
    return out.reshape(N, C, H, W)


def reference(x, w1, b1, w2, b2):
    dn = ('NCHW', 'OIHW', 'NCHW')
    y = jax.lax.conv_general_dilated(x, w1, (1, 1), ((1, 1), (1, 1)),
                                     dimension_numbers=dn)
    y = y + b1[None, :, None, None]
    y = jnp.maximum(y, 0.0)
    y = jax.lax.conv_general_dilated(y, w2, (1, 1), ((1, 1), (1, 1)),
                                     dimension_numbers=dn)
    y = y + b2[None, :, None, None]
    return y + x


if __name__ == "__main__":
    N, C, H, W = 2, 4, 16, 16
    key = jax.random.PRNGKey(0)
    kx, k1, k2, k3, k4 = jax.random.split(key, 5)

    x = jax.random.normal(kx, (N, C, H, W), jnp.float32)
    # Deterministic synthetic parameters (Conv2d: weight (Cout,Cin,3,3), bias (Cout,))
    w1 = jax.random.normal(k1, (C, C, 3, 3), jnp.float32) * 0.1
    b1 = jax.random.normal(k2, (C,), jnp.float32) * 0.1
    w2 = jax.random.normal(k3, (C, C, 3, 3), jnp.float32) * 0.1
    b2 = jax.random.normal(k4, (C,), jnp.float32) * 0.1

    out = residual_block(x, w1, b1, w2, b2)
    out = jax.block_until_ready(out)

    ref = reference(x, w1, b1, w2, b2)
    assert out.shape == (N, C, H, W)
    assert jnp.allclose(out, ref, atol=1e-4, rtol=1e-4), "mismatch vs reference"

    print("KERNEL_OK")
</pallas_src>

<mosaic_0001>
module attributes {stable_mosaic.version = 11 : i64} {
  func.func @_residual_block_kernel(%arg0: i32, %arg1: memref<1x8x256xf32, #tpu.memory_space<vmem>>, %arg2: memref<9x8x8xf32, #tpu.memory_space<vmem>>, %arg3: memref<8x1xf32, #tpu.memory_space<vmem>>, %arg4: memref<9x8x8xf32, #tpu.memory_space<vmem>>, %arg5: memref<8x1xf32, #tpu.memory_space<vmem>>, %arg6: memref<1x8x256xf32, #tpu.memory_space<vmem>>) attributes {dimension_semantics = [#tpu.dimension_semantics<parallel>], iteration_bounds = array<i64: 1>, scalar_prefetch = 0 : i64, scratch_operands = 0 : i64, tpu.core_type = #tpu.core_type<tc>, window_params = [{transform_indices = @transform_0, window_bounds = array<i64: 1, 8, 256>}, {pipeline_mode = #tpu.pipeline_mode<synchronous>, transform_indices = @transform_1, window_bounds = array<i64: 9, 8, 8>}, {pipeline_mode = #tpu.pipeline_mode<synchronous>, transform_indices = @transform_2, window_bounds = array<i64: 8, 1>}, {pipeline_mode = #tpu.pipeline_mode<synchronous>, transform_indices = @transform_3, window_bounds = array<i64: 9, 8, 8>}, {pipeline_mode = #tpu.pipeline_mode<synchronous>, transform_indices = @transform_4, window_bounds = array<i64: 8, 1>}, {transform_indices = @transform_5, window_bounds = array<i64: 1, 8, 256>}]} {
    %c0 = arith.constant 0 : index
    %c0_0 = arith.constant 0 : index
    %c0_1 = arith.constant 0 : index
    %0 = vector.load %arg1[%c0, %c0_0, %c0_1] : memref<1x8x256xf32, #tpu.memory_space<vmem>>, vector<1x8x256xf32>
    %1 = vector.shape_cast %0 : vector<1x8x256xf32> to vector<8x256xf32>
    %2 = tpu.iota {dimensions = array<i32: 1>} : vector<1x256xi32>
    %c16_i32 = arith.constant 16 : i32
    %c0_i32 = arith.constant 0 : i32
    %3 = arith.cmpi eq, %c16_i32, %c0_i32 : i32
    %c1_i32 = arith.constant 1 : i32
    %4 = arith.select %3, %c1_i32, %c16_i32 : i32
    %5 = vector.broadcast %4 : i32 to vector<1x256xi32>
    %6 = arith.remsi %2, %5 : vector<1x256xi32>
    %c0_i32_2 = arith.constant 0 : i32
    %7 = vector.broadcast %c0_i32_2 : i32 to vector<1x256xi32>
    %8 = arith.cmpi ne, %6, %7 : vector<1x256xi32>
    %c0_i32_3 = arith.constant 0 : i32
    %9 = vector.broadcast %c0_i32_3 : i32 to vector<1x256xi32>
    %10 = arith.cmpi slt, %6, %9 : vector<1x256xi32>
    %c0_i32_4 = arith.constant 0 : i32
    %11 = arith.cmpi slt, %4, %c0_i32_4 : i32
    %12 = vector.broadcast %11 : i1 to vector<1x256xi1>
    %13 = vector.broadcast %12 : vector<1x256xi1> to vector<1x256xi1>
    %14 = arith.xori %10, %13 : vector<1x256xi1>
    %15 = arith.andi %14, %8 : vector<1x256xi1>
    %16 = vector.broadcast %4 : i32 to vector<1x256xi32>
    %17 = arith.addi %6, %16 : vector<1x256xi32>
    %18 = arith.select %15, %17, %6 : vector<1x256xi1>, vector<1x256xi32>
    %c16_i32_5 = arith.constant 16 : i32
    %19 = vector.broadcast %c16_i32_5 : i32 to vector<1x256xi32>
    %20 = arith.cmpi sge, %2, %19 : vector<1x256xi32>
    %c240_i32 = arith.constant 240 : i32
    %21 = vector.broadcast %c240_i32 : i32 to vector<1x256xi32>
    %22 = arith.cmpi slt, %2, %21 : vector<1x256xi32>
    %c1_i32_6 = arith.constant 1 : i32
    %23 = vector.broadcast %c1_i32_6 : i32 to vector<1x256xi32>
    %24 = arith.cmpi sge, %18, %23 : vector<1x256xi32>
    %c14_i32 = arith.constant 14 : i32
    %25 = vector.broadcast %c14_i32 : i32 to vector<1x256xi32>
    %26 = arith.cmpi sle, %18, %25 : vector<1x256xi32>
    %27 = arith.andi %20, %24 : vector<1x256xi1>
    %28 = vector.shape_cast %27 : vector<1x256xi1> to vector<1x256xi1>
    %29 = vector.broadcast %28 : vector<1x256xi1> to vector<8x256xi1>
    %30 = vector.shape_cast %20 : vector<1x256xi1> to vector<1x256xi1>
    %31 = vector.broadcast %30 : vector<1x256xi1> to vector<8x256xi1>
    %32 = arith.andi %20, %26 : vector<1x256xi1>
    %33 = vector.shape_cast %32 : vector<1x256xi1> to vector<1x256xi1>
    %34 = vector.broadcast %33 : vector<1x256xi1> to vector<8x256xi1>
    %35 = vector.shape_cast %24 : vector<1x256xi1> to vector<1x256xi1>
    %36 = vector.broadcast %35 : vector<1x256xi1> to vector<8x256xi1>
    %37 = vector.shape_cast %26 : vector<1x256xi1> to vector<1x256xi1>
    %38 = vector.broadcast %37 : vector<1x256xi1> to vector<8x256xi1>
    %39 = arith.andi %22, %24 : vector<1x256xi1>
    %40 = vector.shape_cast %39 : vector<1x256xi1> to vector<1x256xi1>
    %41 = vector.broadcast %40 : vector<1x256xi1> to vector<8x256xi1>
    %42 = vector.shape_cast %22 : vector<1x256xi1> to vector<1x256xi1>
    %43 = vector.broadcast %42 : vector<1x256xi1> to vector<8x256xi1>
    %44 = arith.andi %22, %26 : vector<1x256xi1>
    %45 = vector.shape_cast %44 : vector<1x256xi1> to vector<1x256xi1>
    %46 = vector.broadcast %45 : vector<1x256xi1> to vector<8x256xi1>
    %c0_7 = arith.constant 0 : index
    %c0_8 = arith.constant 0 : index
    %c0_9 = arith.constant 0 : index
    %47 = vector.load %arg2[%c0_7, %c0_8, %c0_9] : memref<9x8x8xf32, #tpu.memory_space<vmem>>, vector<9x8x8xf32>
    %c0_10 = arith.constant 0 : index
    %c0_11 = arith.constant 0 : index
    %48 = vector.load %arg3[%c0_10, %c0_11] : memref<8x1xf32, #tpu.memory_space<vmem>>, vector<8x1xf32>
    %49 = vector.extract_strided_slice %47 {offsets = [4, 0, 0], sizes = [1, 8, 8], strides = [1, 1, 1]} : vector<9x8x8xf32> to vector<1x8x8xf32>
    %50 = vector.shape_cast %49 : vector<1x8x8xf32> to vector<8x8xf32>
    %cst = arith.constant dense<0.000000e+00> : vector<8x256xf32>
    %51 = tpu.matmul %50, %1, %cst {dimension_numbers = #tpu.dot_dimension_numbers<[1], [0], [0], [1], [0, 0, 1, 1], [], []>} : vector<8x8xf32>, vector<8x256xf32>, vector<8x256xf32> -> vector<8x256xf32>
    %52 = vector.broadcast %48 : vector<8x1xf32> to vector<8x256xf32>
    %53 = arith.addf %51, %52 : vector<8x256xf32>
    %c17_i32 = arith.constant 17 : i32
    %54 = tpu.dynamic_rotate %1 by %c17_i32 dim 1 : vector<8x256xf32>, i32 -> vector<8x256xf32>
    %cst_12 = arith.constant 0.000000e+00 : f32
    %55 = vector.broadcast %cst_12 : f32 to vector<8x256xf32>
    %56 = arith.select %29, %54, %55 : vector<8x256xi1>, vector<8x256xf32>
    %57 = vector.extract_strided_slice %47 {offsets = [0, 0, 0], sizes = [1, 8, 8], strides = [1, 1, 1]} : vector<9x8x8xf32> to vector<1x8x8xf32>
    %58 = vector.shape_cast %57 : vector<1x8x8xf32> to vector<8x8xf32>
    %cst_13 = arith.constant dense<0.000000e+00> : vector<8x256xf32>
    %59 = tpu.matmul %58, %56, %cst_13 {dimension_numbers = #tpu.dot_dimension_numbers<[1], [0], [0], [1], [0, 0, 1, 1], [], []>} : vector<8x8xf32>, vector<8x256xf32>, vector<8x256xf32> -> vector<8x256xf32>
    %60 = arith.addf %53, %59 : vector<8x256xf32>
    %c16_i32_14 = arith.constant 16 : i32
    %61 = tpu.dynamic_rotate %1 by %c16_i32_14 dim 1 : vector<8x256xf32>, i32 -> vector<8x256xf32>
    %cst_15 = arith.constant 0.000000e+00 : f32
    %62 = vector.broadcast %cst_15 : f32 to vector<8x256xf32>
    %63 = arith.select %31, %61, %62 : vector<8x256xi1>, vector<8x256xf32>
    %64 = vector.extract_strided_slice %47 {offsets = [1, 0, 0], sizes = [1, 8, 8], strides = [1, 1, 1]} : vector<9x8x8xf32> to vector<1x8x8xf32>
    %65 = vector.shape_cast %64 : vector<1x8x8xf32> to vector<8x8xf32>
    %cst_16 = arith.constant dense<0.000000e+00> : vector<8x256xf32>
    %66 = tpu.matmul %65, %63, %cst_16 {dimension_numbers = #tpu.dot_dimension_numbers<[1], [0], [0], [1], [0, 0, 1, 1], [], []>} : vector<8x8xf32>, vector<8x256xf32>, vector<8x256xf32> -> vector<8x256xf32>
    %67 = arith.addf %60, %66 : vector<8x256xf32>
    %c15_i32 = arith.constant 15 : i32
    %68 = tpu.dynamic_rotate %1 by %c15_i32 dim 1 : vector<8x256xf32>, i32 -> vector<8x256xf32>
    %cst_17 = arith.constant 0.000000e+00 : f32
    %69 = vector.broadcast %cst_17 : f32 to vector<8x256xf32>
    %70 = arith.select %34, %68, %69 : vector<8x256xi1>, vector<8x256xf32>
    %71 = vector.extract_strided_slice %47 {offsets = [2, 0, 0], sizes = [1, 8, 8], strides = [1, 1, 1]} : vector<9x8x8xf32> to vector<1x8x8xf32>
    %72 = vector.shape_cast %71 : vector<1x8x8xf32> to vector<8x8xf32>
    %cst_18 = arith.constant dense<0.000000e+00> : vector<8x256xf32>
    %73 = tpu.matmul %72, %70, %cst_18 {dimension_numbers = #tpu.dot_dimension_numbers<[1], [0], [0], [1], [0, 0, 1, 1], [], []>} : vector<8x8xf32>, vector<8x256xf32>, vector<8x256xf32> -> vector<8x256xf32>
    %74 = arith.addf %67, %73 : vector<8x256xf32>
    %c1_i32_19 = arith.constant 1 : i32
    %75 = tpu.dynamic_rotate %1 by %c1_i32_19 dim 1 : vector<8x256xf32>, i32 -> vector<8x256xf32>
    %cst_20 = arith.constant 0.000000e+00 : f32
    %76 = vector.broadcast %cst_20 : f32 to vector<8x256xf32>
    %77 = arith.select %36, %75, %76 : vector<8x256xi1>, vector<8x256xf32>
    %78 = vector.extract_strided_slice %47 {offsets = [3, 0, 0], sizes = [1, 8, 8], strides = [1, 1, 1]} : vector<9x8x8xf32> to vector<1x8x8xf32>
    %79 = vector.shape_cast %78 : vector<1x8x8xf32> to vector<8x8xf32>
    %cst_21 = arith.constant dense<0.000000e+00> : vector<8x256xf32>
    %80 = tpu.matmul %79, %77, %cst_21 {dimension_numbers = #tpu.dot_dimension_numbers<[1], [0], [0], [1], [0, 0, 1, 1], [], []>} : vector<8x8xf32>, vector<8x256xf32>, vector<8x256xf32> -> vector<8x256xf32>
    %81 = arith.addf %74, %80 : vector<8x256xf32>
    %c255_i32 = arith.constant 255 : i32
    %82 = tpu.dynamic_rotate %1 by %c255_i32 dim 1 : vector<8x256xf32>, i32 -> vector<8x256xf32>
    %cst_22 = arith.constant 0.000000e+00 : f32
    %83 = vector.broadcast %cst_22 : f32 to vector<8x256xf32>
    %84 = arith.select %38, %82, %83 : vector<8x256xi1>, vector<8x256xf32>
    %85 = vector.extract_strided_slice %47 {offsets = [5, 0, 0], sizes = [1, 8, 8], strides = [1, 1, 1]} : vector<9x8x8xf32> to vector<1x8x8xf32>
    %86 = vector.shape_cast %85 : vector<1x8x8xf32> to vector<8x8xf32>
    %cst_23 = arith.constant dense<0.000000e+00> : vector<8x256xf32>
    %87 = tpu.matmul %86, %84, %cst_23 {dimension_numbers = #tpu.dot_dimension_numbers<[1], [0], [0], [1], [0, 0, 1, 1], [], []>} : vector<8x8xf32>, vector<8x256xf32>, vector<8x256xf32> -> vector<8x256xf32>
    %88 = arith.addf %81, %87 : vector<8x256xf32>
    %c241_i32 = arith.constant 241 : i32
    %89 = tpu.dynamic_rotate %1 by %c241_i32 dim 1 : vector<8x256xf32>, i32 -> vector<8x256xf32>
    %cst_24 = arith.constant 0.000000e+00 : f32
    %90 = vector.broadcast %cst_24 : f32 to vector<8x256xf32>
    %91 = arith.select %41, %89, %90 : vector<8x256xi1>, vector<8x256xf32>
    %92 = vector.extract_strided_slice %47 {offsets = [6, 0, 0], sizes = [1, 8, 8], strides = [1, 1, 1]} : vector<9x8x8xf32> to vector<1x8x8xf32>
    %93 = vector.shape_cast %92 : vector<1x8x8xf32> to vector<8x8xf32>
    %cst_25 = arith.constant dense<0.000000e+00> : vector<8x256xf32>
    %94 = tpu.matmul %93, %91, %cst_25 {dimension_numbers = #tpu.dot_dimension_numbers<[1], [0], [0], [1], [0, 0, 1, 1], [], []>} : vector<8x8xf32>, vector<8x256xf32>, vector<8x256xf32> -> vector<8x256xf32>
    %95 = arith.addf %88, %94 : vector<8x256xf32>
    %c240_i32_26 = arith.constant 240 : i32
    %96 = tpu.dynamic_rotate %1 by %c240_i32_26 dim 1 : vector<8x256xf32>, i32 -> vector<8x256xf32>
    %cst_27 = arith.constant 0.000000e+00 : f32
    %97 = vector.broadcast %cst_27 : f32 to vector<8x256xf32>
    %98 = arith.select %43, %96, %97 : vector<8x256xi1>, vector<8x256xf32>
    %99 = vector.extract_strided_slice %47 {offsets = [7, 0, 0], sizes = [1, 8, 8], strides = [1, 1, 1]} : vector<9x8x8xf32> to vector<1x8x8xf32>
    %100 = vector.shape_cast %99 : vector<1x8x8xf32> to vector<8x8xf32>
    %cst_28 = arith.constant dense<0.000000e+00> : vector<8x256xf32>
    %101 = tpu.matmul %100, %98, %cst_28 {dimension_numbers = #tpu.dot_dimension_numbers<[1], [0], [0], [1], [0, 0, 1, 1], [], []>} : vector<8x8xf32>, vector<8x256xf32>, vector<8x256xf32> -> vector<8x256xf32>
    %102 = arith.addf %95, %101 : vector<8x256xf32>
    %c239_i32 = arith.constant 239 : i32
    %103 = tpu.dynamic_rotate %1 by %c239_i32 dim 1 : vector<8x256xf32>, i32 -> vector<8x256xf32>
    %cst_29 = arith.constant 0.000000e+00 : f32
    %104 = vector.broadcast %cst_29 : f32 to vector<8x256xf32>
    %105 = arith.select %46, %103, %104 : vector<8x256xi1>, vector<8x256xf32>
    %106 = vector.extract_strided_slice %47 {offsets = [8, 0, 0], sizes = [1, 8, 8], strides = [1, 1, 1]} : vector<9x8x8xf32> to vector<1x8x8xf32>
    %107 = vector.shape_cast %106 : vector<1x8x8xf32> to vector<8x8xf32>
    %cst_30 = arith.constant dense<0.000000e+00> : vector<8x256xf32>
    %108 = tpu.matmul %107, %105, %cst_30 {dimension_numbers = #tpu.dot_dimension_numbers<[1], [0], [0], [1], [0, 0, 1, 1], [], []>} : vector<8x8xf32>, vector<8x256xf32>, vector<8x256xf32> -> vector<8x256xf32>
    %109 = arith.addf %102, %108 : vector<8x256xf32>
    %cst_31 = arith.constant 0.000000e+00 : f32
    %110 = vector.broadcast %cst_31 : f32 to vector<8x256xf32>
    %111 = arith.maximumf %109, %110 : vector<8x256xf32>
    %c0_32 = arith.constant 0 : index
    %c0_33 = arith.constant 0 : index
    %c0_34 = arith.constant 0 : index
    %112 = vector.load %arg4[%c0_32, %c0_33, %c0_34] : memref<9x8x8xf32, #tpu.memory_space<vmem>>, vector<9x8x8xf32>
    %c0_35 = arith.constant 0 : index
    %c0_36 = arith.constant 0 : index
    %113 = vector.load %arg5[%c0_35, %c0_36] : memref<8x1xf32, #tpu.memory_space<vmem>>, vector<8x1xf32>
    %114 = vector.extract_strided_slice %112 {offsets = [4, 0, 0], sizes = [1, 8, 8], strides = [1, 1, 1]} : vector<9x8x8xf32> to vector<1x8x8xf32>
    %115 = vector.shape_cast %114 : vector<1x8x8xf32> to vector<8x8xf32>
    %cst_37 = arith.constant dense<0.000000e+00> : vector<8x256xf32>
    %116 = tpu.matmul %115, %111, %cst_37 {dimension_numbers = #tpu.dot_dimension_numbers<[1], [0], [0], [1], [0, 0, 1, 1], [], []>} : vector<8x8xf32>, vector<8x256xf32>, vector<8x256xf32> -> vector<8x256xf32>
    %117 = vector.broadcast %113 : vector<8x1xf32> to vector<8x256xf32>
    %118 = arith.addf %116, %117 : vector<8x256xf32>
    %c17_i32_38 = arith.constant 17 : i32
    %119 = tpu.dynamic_rotate %111 by %c17_i32_38 dim 1 : vector<8x256xf32>, i32 -> vector<8x256xf32>
    %cst_39 = arith.constant 0.000000e+00 : f32
    %120 = vector.broadcast %cst_39 : f32 to vector<8x256xf32>
    %121 = arith.select %29, %119, %120 : vector<8x256xi1>, vector<8x256xf32>
    %122 = vector.extract_strided_slice %112 {offsets = [0, 0, 0], sizes = [1, 8, 8], strides = [1, 1, 1]} : vector<9x8x8xf32> to vector<1x8x8xf32>
    %123 = vector.shape_cast %122 : vector<1x8x8xf32> to vector<8x8xf32>
    %cst_40 = arith.constant dense<0.000000e+00> : vector<8x256xf32>
    %124 = tpu.matmul %123, %121, %cst_40 {dimension_numbers = #tpu.dot_dimension_numbers<[1], [0], [0], [1], [0, 0, 1, 1], [], []>} : vector<8x8xf32>, vector<8x256xf32>, vector<8x256xf32> -> vector<8x256xf32>
    %125 = arith.addf %118, %124 : vector<8x256xf32>
    %c16_i32_41 = arith.constant 16 : i32
    %126 = tpu.dynamic_rotate %111 by %c16_i32_41 dim 1 : vector<8x256xf32>, i32 -> vector<8x256xf32>
    %cst_42 = arith.constant 0.000000e+00 : f32
    %127 = vector.broadcast %cst_42 : f32 to vector<8x256xf32>
    %128 = arith.select %31, %126, %127 : vector<8x256xi1>, vector<8x256xf32>
    %129 = vector.extract_strided_slice %112 {offsets = [1, 0, 0], sizes = [1, 8, 8], strides = [1, 1, 1]} : vector<9x8x8xf32> to vector<1x8x8xf32>
    %130 = vector.shape_cast %129 : vector<1x8x8xf32> to vector<8x8xf32>
    %cst_43 = arith.constant dense<0.000000e+00> : vector<8x256xf32>
    %131 = tpu.matmul %130, %128, %cst_43 {dimension_numbers = #tpu.dot_dimension_numbers<[1], [0], [0], [1], [0, 0, 1, 1], [], []>} : vector<8x8xf32>, vector<8x256xf32>, vector<8x256xf32> -> vector<8x256xf32>
    %132 = arith.addf %125, %131 : vector<8x256xf32>
    %c15_i32_44 = arith.constant 15 : i32
    %133 = tpu.dynamic_rotate %111 by %c15_i32_44 dim 1 : vector<8x256xf32>, i32 -> vector<8x256xf32>
    %cst_45 = arith.constant 0.000000e+00 : f32
    %134 = vector.broadcast %cst_45 : f32 to vector<8x256xf32>
    %135 = arith.select %34, %133, %134 : vector<8x256xi1>, vector<8x256xf32>
    %136 = vector.extract_strided_slice %112 {offsets = [2, 0, 0], sizes = [1, 8, 8], strides = [1, 1, 1]} : vector<9x8x8xf32> to vector<1x8x8xf32>
    %137 = vector.shape_cast %136 : vector<1x8x8xf32> to vector<8x8xf32>
    %cst_46 = arith.constant dense<0.000000e+00> : vector<8x256xf32>
    %138 = tpu.matmul %137, %135, %cst_46 {dimension_numbers = #tpu.dot_dimension_numbers<[1], [0], [0], [1], [0, 0, 1, 1], [], []>} : vector<8x8xf32>, vector<8x256xf32>, vector<8x256xf32> -> vector<8x256xf32>
    %139 = arith.addf %132, %138 : vector<8x256xf32>
    %c1_i32_47 = arith.constant 1 : i32
    %140 = tpu.dynamic_rotate %111 by %c1_i32_47 dim 1 : vector<8x256xf32>, i32 -> vector<8x256xf32>
    %cst_48 = arith.constant 0.000000e+00 : f32
    %141 = vector.broadcast %cst_48 : f32 to vector<8x256xf32>
    %142 = arith.select %36, %140, %141 : vector<8x256xi1>, vector<8x256xf32>
    %143 = vector.extract_strided_slice %112 {offsets = [3, 0, 0], sizes = [1, 8, 8], strides = [1, 1, 1]} : vector<9x8x8xf32> to vector<1x8x8xf32>
    %144 = vector.shape_cast %143 : vector<1x8x8xf32> to vector<8x8xf32>
    %cst_49 = arith.constant dense<0.000000e+00> : vector<8x256xf32>
    %145 = tpu.matmul %144, %142, %cst_49 {dimension_numbers = #tpu.dot_dimension_numbers<[1], [0], [0], [1], [0, 0, 1, 1], [], []>} : vector<8x8xf32>, vector<8x256xf32>, vector<8x256xf32> -> vector<8x256xf32>
    %146 = arith.addf %139, %145 : vector<8x256xf32>
    %c255_i32_50 = arith.constant 255 : i32
    %147 = tpu.dynamic_rotate %111 by %c255_i32_50 dim 1 : vector<8x256xf32>, i32 -> vector<8x256xf32>
    %cst_51 = arith.constant 0.000000e+00 : f32
    %148 = vector.broadcast %cst_51 : f32 to vector<8x256xf32>
    %149 = arith.select %38, %147, %148 : vector<8x256xi1>, vector<8x256xf32>
    %150 = vector.extract_strided_slice %112 {offsets = [5, 0, 0], sizes = [1, 8, 8], strides = [1, 1, 1]} : vector<9x8x8xf32> to vector<1x8x8xf32>
    %151 = vector.shape_cast %150 : vector<1x8x8xf32> to vector<8x8xf32>
    %cst_52 = arith.constant dense<0.000000e+00> : vector<8x256xf32>
    %152 = tpu.matmul %151, %149, %cst_52 {dimension_numbers = #tpu.dot_dimension_numbers<[1], [0], [0], [1], [0, 0, 1, 1], [], []>} : vector<8x8xf32>, vector<8x256xf32>, vector<8x256xf32> -> vector<8x256xf32>
    %153 = arith.addf %146, %152 : vector<8x256xf32>
    %c241_i32_53 = arith.constant 241 : i32
    %154 = tpu.dynamic_rotate %111 by %c241_i32_53 dim 1 : vector<8x256xf32>, i32 -> vector<8x256xf32>
    %cst_54 = arith.constant 0.000000e+00 : f32
    %155 = vector.broadcast %cst_54 : f32 to vector<8x256xf32>
    %156 = arith.select %41, %154, %155 : vector<8x256xi1>, vector<8x256xf32>
    %157 = vector.extract_strided_slice %112 {offsets = [6, 0, 0], sizes = [1, 8, 8], strides = [1, 1, 1]} : vector<9x8x8xf32> to vector<1x8x8xf32>
    %158 = vector.shape_cast %157 : vector<1x8x8xf32> to vector<8x8xf32>
    %cst_55 = arith.constant dense<0.000000e+00> : vector<8x256xf32>
    %159 = tpu.matmul %158, %156, %cst_55 {dimension_numbers = #tpu.dot_dimension_numbers<[1], [0], [0], [1], [0, 0, 1, 1], [], []>} : vector<8x8xf32>, vector<8x256xf32>, vector<8x256xf32> -> vector<8x256xf32>
    %160 = arith.addf %153, %159 : vector<8x256xf32>
    %c240_i32_56 = arith.constant 240 : i32
    %161 = tpu.dynamic_rotate %111 by %c240_i32_56 dim 1 : vector<8x256xf32>, i32 -> vector<8x256xf32>
    %cst_57 = arith.constant 0.000000e+00 : f32
    %162 = vector.broadcast %cst_57 : f32 to vector<8x256xf32>
    %163 = arith.select %43, %161, %162 : vector<8x256xi1>, vector<8x256xf32>
    %164 = vector.extract_strided_slice %112 {offsets = [7, 0, 0], sizes = [1, 8, 8], strides = [1, 1, 1]} : vector<9x8x8xf32> to vector<1x8x8xf32>
    %165 = vector.shape_cast %164 : vector<1x8x8xf32> to vector<8x8xf32>
    %cst_58 = arith.constant dense<0.000000e+00> : vector<8x256xf32>
    %166 = tpu.matmul %165, %163, %cst_58 {dimension_numbers = #tpu.dot_dimension_numbers<[1], [0], [0], [1], [0, 0, 1, 1], [], []>} : vector<8x8xf32>, vector<8x256xf32>, vector<8x256xf32> -> vector<8x256xf32>
    %167 = arith.addf %160, %166 : vector<8x256xf32>
    %c239_i32_59 = arith.constant 239 : i32
    %168 = tpu.dynamic_rotate %111 by %c239_i32_59 dim 1 : vector<8x256xf32>, i32 -> vector<8x256xf32>
    %cst_60 = arith.constant 0.000000e+00 : f32
    %169 = vector.broadcast %cst_60 : f32 to vector<8x256xf32>
    %170 = arith.select %46, %168, %169 : vector<8x256xi1>, vector<8x256xf32>
    %171 = vector.extract_strided_slice %112 {offsets = [8, 0, 0], sizes = [1, 8, 8], strides = [1, 1, 1]} : vector<9x8x8xf32> to vector<1x8x8xf32>
    %172 = vector.shape_cast %171 : vector<1x8x8xf32> to vector<8x8xf32>
    %cst_61 = arith.constant dense<0.000000e+00> : vector<8x256xf32>
    %173 = tpu.matmul %172, %170, %cst_61 {dimension_numbers = #tpu.dot_dimension_numbers<[1], [0], [0], [1], [0, 0, 1, 1], [], []>} : vector<8x8xf32>, vector<8x256xf32>, vector<8x256xf32> -> vector<8x256xf32>
    %174 = arith.addf %167, %173 : vector<8x256xf32>
    %175 = arith.addf %174, %1 : vector<8x256xf32>
    %c0_62 = arith.constant 0 : index
    %c0_63 = arith.constant 0 : index
    %c0_64 = arith.constant 0 : index
    %176 = vector.load %arg6[%c0_62, %c0_63, %c0_64] : memref<1x8x256xf32, #tpu.memory_space<vmem>>, vector<1x8x256xf32>
    %177 = vector.shape_cast %176 : vector<1x8x256xf32> to vector<8x256xf32>
    %178 = vector.shape_cast %175 : vector<8x256xf32> to vector<1x8x256xf32>
    tpu.vector_store %arg6[%c0_62, %c0_63, %c0_64], %178 {strides = array<i32>} : memref<1x8x256xf32, #tpu.memory_space<vmem>>, vector<1x8x256xf32>,
    return
  }
  func.func @transform_0(%arg0: i32) -> (i32, i32, i32) {
    %c0_i32 = arith.constant 0 : i32
    %c0_i32_0 = arith.constant 0 : i32
    %c0_i32_1 = arith.constant 0 : i32
    return %arg0, %c0_i32, %c0_i32_0 : i32, i32, i32
  }
  func.func @transform_1(%arg0: i32) -> (i32, i32, i32) {
    %c0_i32 = arith.constant 0 : i32
    %c0_i32_0 = arith.constant 0 : i32
    %c0_i32_1 = arith.constant 0 : i32
    %c0_i32_2 = arith.constant 0 : i32
    return %c0_i32, %c0_i32_0, %c0_i32_1 : i32, i32, i32
  }
  func.func @transform_2(%arg0: i32) -> (i32, i32) {
    %c0_i32 = arith.constant 0 : i32
    %c0_i32_0 = arith.constant 0 : i32
    %c0_i32_1 = arith.constant 0 : i32
    return %c0_i32, %c0_i32_0 : i32, i32
  }
  func.func @transform_3(%arg0: i32) -> (i32, i32, i32) {
    %c0_i32 = arith.constant 0 : i32
    %c0_i32_0 = arith.constant 0 : i32
    %c0_i32_1 = arith.constant 0 : i32
    %c0_i32_2 = arith.constant 0 : i32
    return %c0_i32, %c0_i32_0, %c0_i32_1 : i32, i32, i32
  }
  func.func @transform_4(%arg0: i32) -> (i32, i32) {
    %c0_i32 = arith.constant 0 : i32
    %c0_i32_0 = arith.constant 0 : i32
    %c0_i32_1 = arith.constant 0 : i32
    return %c0_i32, %c0_i32_0 : i32, i32
  }
  func.func @transform_5(%arg0: i32) -> (i32, i32, i32) {
    %c0_i32 = arith.constant 0 : i32
    %c0_i32_0 = arith.constant 0 : i32
    %c0_i32_1 = arith.constant 0 : i32
    return %arg0, %c0_i32, %c0_i32_0 : i32, i32, i32
  }
}

</mosaic_0001>

<llo_original>
// kernel: tile.0
$region0: #{tile.0}
  %s0 = inlined_call_operand.vmem [shape: f32[2,4], index: 0, kind: input, shape index: {}]
  %s1 = inlined_call_operand.vmem [shape: f32[8,1], index: 1, kind: output, shape index: {}]
  $region1: #{tile.0} parent=0
    #allocation0 [shape = 'u8[4096]{0}', space=vmem, size = 0x1000, scoped, tag = 'scoped mem for input reshape']
    %s3 = sshll.u32 1, 2
    %s4 = ssub.s32 %s3, 1
    %v5 = vld [vmem:[%s0] sm:%s4]
    %6 = vst [vmem:[#allocation0] sm:%s4] %v5
    %v7 = vld [vmem:[#allocation0] sm:$0x3]
    %vm8 = vcmask 7168
    %9 = vst.msk [vmem:[%s1] ss:$4 sm:$0x3] %vm8, %v7
    %v10 = vld [vmem:[#allocation0] sm:$0x3]
    %11 = vrot.lane.b32.xlu0 %v10, 127
    %v12 = vpop.permute.xlu0 %11
    %vm13 = vcmask 7168
    %s14 = scalar_lea.vmem %s1, 1
    %15 = vst.msk [vmem:[%s14] ss:$4 sm:$0x3] %vm13, %v12
    %v16 = vld [vmem:[#allocation0] sm:$0x3]
    %17 = vrot.lane.b32.xlu0 %v16, 126
    %v18 = vpop.permute.xlu0 %17
    %vm19 = vcmask 7168
    %s20 = scalar_lea.vmem %s1, 2
    %21 = vst.msk [vmem:[%s20] ss:$4 sm:$0x3] %vm19, %v18
    %v22 = vld [vmem:[#allocation0] sm:$0x3]
    %23 = vrot.lane.b32.xlu0 %v22, 125
    %v24 = vpop.permute.xlu0 %23
    %vm25 = vcmask 7168
    %s26 = scalar_lea.vmem %s1, 3
    %27 = vst.msk [vmem:[%s26] ss:$4 sm:$0x3] %vm25, %v24

// kernel: tile.13
$region0: #{tile.13}
  #allocation0 [shape = 's32[1]{0}', space=sflag, size = 0x4, scoped, tag = 'scoped memory for tile.13']
  %s0 = inlined_call_operand.vmem [shape: f32[4], index: 0, kind: input, shape index: {}]
  %s1 = inlined_call_operand.vmem [shape: f32[2,4], index: 1, kind: output, shape index: {}]
  // Predicated region
  $region2: #{tile.13} parent=0 // pred_check
    _
  $region3: #{tile.13} parent=0 // pred_check_branch
    %3 = sbr.rel (0) target = $region5
  $region4: #{tile.13} parent=0 // pred_region
    _
  $region5: #{tile.13} parent=0 // pred_fallthru
    _
  %v4 = vld [vmem:[%s0] ss:$0 sm:$0xff]
  %5 = vst [vmem:[%s1] sm:$0x3] %v4

// kernel: residual_block.1
$region0: #{residual_block.1}
  #allocation0 [shape = 'u32[]', space=smem, size = 0x4, offset = 0x4, fixed_abs, tag = 'smem constant byte address 0x4 - core index']
  #allocation1 [shape = 'u32[144,128]{1,0:T(1,128)}', space=vmem, size = 0x12000, scoped, tag = 'internal scratch']
  %s0 = inlined_call_operand.vmem [shape: f32[1,8,256], index: 0, kind: input, shape index: {}]
  %s1 = inlined_call_operand.vmem [shape: f32[9,8,8], index: 1, kind: input, shape index: {}]
  %s2 = inlined_call_operand.vmem [shape: f32[8,1], index: 2, kind: input, shape index: {}]
  %s3 = inlined_call_operand.vmem [shape: f32[9,8,8], index: 3, kind: input, shape index: {}]
  %s4 = inlined_call_operand.vmem [shape: f32[8,1], index: 4, kind: input, shape index: {}]
  %s5 = inlined_call_operand.vmem [shape: f32[1,8,256], index: 5, kind: output, shape index: {}]
  %s6 = sld [smem:[#allocation0]]
  $region30: #{residual_block.1} parent=0
    _
  %s8 = ssub.s32 1, %s6
  %s9 = scalar_select 0, %s8, %s6
  // Predicated region
  $region2: #{residual_block.1} parent=0 // pred_check
    _
  $region3: #{residual_block.1} parent=0 // pred_check_branch
    %11 = sbr.rel (0) target = $region5
  $region4: #{residual_block.1} parent=0 // pred_region
    _
  $region5: #{residual_block.1} parent=0 // pred_fallthru
    _
  // Predicated region
  $region6: #{residual_block.1} parent=0 // pred_check
    _
  $region7: #{residual_block.1} parent=0 // pred_check_branch
    %13 = sbr.rel (0) target = $region9
  $region8: #{residual_block.1} parent=0 // pred_region
    _
  $region9: #{residual_block.1} parent=0 // pred_fallthru
    _
  // Predicated region
  $region10: #{residual_block.1} parent=0 // pred_check
    _
  $region11: #{residual_block.1} parent=0 // pred_check_branch
    %15 = sbr.rel (0) target = $region13
  $region12: #{residual_block.1} parent=0 // pred_region
    _
  $region13: #{residual_block.1} parent=0 // pred_fallthru
    _
  // Predicated region
  $region14: #{residual_block.1} parent=0 // pred_check
    _
  $region15: #{residual_block.1} parent=0 // pred_check_branch
    %17 = sbr.rel (0) target = $region17
  $region16: #{residual_block.1} parent=0 // pred_region
    _
  $region17: #{residual_block.1} parent=0 // pred_fallthru
    _
  // Predicated region
  $region18: #{residual_block.1} parent=0 // pred_check
    _
  $region19: #{residual_block.1} parent=0 // pred_check_branch
    %19 = sbr.rel (0) target = $region21
  $region20: #{residual_block.1} parent=0 // pred_region
    _
  $region21: #{residual_block.1} parent=0 // pred_fallthru
    _
  %v20 = vld [vmem:[%s0] sm:$0xff]
  %v21 = vld [vmem:[%s0 + $0x8] sm:$0xff]
  %v22 = vlaneseq
  %v23 = vand.u32 %v22, 127
  %v24 = vadd.s32 %v23, 128
  %vm25 = vcmp.lt.s32.totalorder %v23, 0
  %v26 = vsub.s32 0, %v23
  %v27 = vsel %vm25, %v26, %v23
  %v28 = vshrl.u32 %v27, 4
  %v29 = vand.u32 %v27, 15
  %v30 = vsub.s32 0, %v29
  %v31 = vsel %vm25, %v30, %v29
  %vm32 = vcmp.lt.s32.totalorder %v24, 0
  %v33 = vsub.s32 0, %v24
  %v34 = vsel %vm32, %v33, %v24
  %v35 = vshrl.u32 %v34, 4
  %v36 = vand.u32 %v34, 15
  %v37 = vsub.s32 0, %v36
  %v38 = vsel %vm32, %v37, %v36
  %vm39 = vcmp.ne.s32.totalorder %v31, 0
  %vm40 = vcmp.ne.s32.totalorder %v38, 0
  %vm41 = vcmp.lt.s32.totalorder %v31, 0
  %vm42 = vcmp.lt.s32.totalorder %v38, 0
  %vm43 = vmand %vm41, %vm39
  %vm44 = vmand %vm42, %vm40
  %v45 = vadd.s32 %v31, 16
  %v46 = vadd.s32 %v38, 16
  %v47 = vsel %vm43, %v45, %v31
  %v48 = vsel %vm44, %v46, %v38
  %vm49 = vcmp.ge.s32.totalorder %v23, 16
  %vm50 = vcmp.ge.s32.totalorder %v24, 16
  %vm51 = vcmp.lt.s32.totalorder %v23, 240
  %vm52 = vcmp.lt.s32.totalorder %v24, 240
  %vm53 = vcmp.ge.s32.totalorder %v47, 1
  %vm54 = vcmp.ge.s32.totalorder %v48, 1
  %vm55 = vcmp.le.s32.totalorder %v47, 14
  %vm56 = vcmp.le.s32.totalorder %v48, 14
  %vm57 = vmand %vm49, %vm53
  %vm58 = vmand %vm50, %vm54
  %v59 = vsel %vm57, 1, 0
  %v60 = vsel %vm58, 1, 0
  %vm61 = vcmp.eq.s32.totalorder %v59, 1
  %vm62 = vcmp.eq.s32.totalorder %v60, 1
  %v63 = vsel %vm49, 1, 0
  %v64 = vsel %vm50, 1, 0
  %vm65 = vcmp.eq.s32.totalorder %v63, 1
  %vm66 = vcmp.eq.s32.totalorder %v64, 1
  %vm67 = vmand %vm49, %vm55
  %vm68 = vmand %vm50, %vm56
  %v69 = vsel %vm67, 1, 0
  %v70 = vsel %vm68, 1, 0
  %vm71 = vcmp.eq.s32.totalorder %v69, 1
  %vm72 = vcmp.eq.s32.totalorder %v70, 1
  %v73 = vsel %vm53, 1, 0
  %v74 = vsel %vm54, 1, 0
  %vm75 = vcmp.eq.s32.totalorder %v73, 1
  %vm76 = vcmp.eq.s32.totalorder %v74, 1
  %v77 = vsel %vm55, 1, 0
  %v78 = vsel %vm56, 1, 0
  %vm79 = vcmp.eq.s32.totalorder %v77, 1
  %vm80 = vcmp.eq.s32.totalorder %v78, 1
  %vm81 = vmand %vm51, %vm53
  %vm82 = vmand %vm52, %vm54
  %v83 = vsel %vm81, 1, 0
  %v84 = vsel %vm82, 1, 0
  %vm85 = vcmp.eq.s32.totalorder %v83, 1
  %vm86 = vcmp.eq.s32.totalorder %v84, 1
  %v87 = vsel %vm51, 1, 0
  %v88 = vsel %vm52, 1, 0
  %vm89 = vcmp.eq.s32.totalorder %v87, 1
  %vm90 = vcmp.eq.s32.totalorder %v88, 1
  %vm91 = vmand %vm51, %vm55
  %vm92 = vmand %vm52, %vm56
  %v93 = vsel %vm91, 1, 0
  %v94 = vsel %vm92, 1, 0
  %vm95 = vcmp.eq.s32.totalorder %v93, 1
  %vm96 = vcmp.eq.s32.totalorder %v94, 1
  %v97 = vld [vmem:[%s1] sm:$0xff]
  %v98 = vld [vmem:[%s1 + $0x8] sm:$0xff]
  %v99 = vld [vmem:[%s1 + $0x10] sm:$0xff]
  %v100 = vld [vmem:[%s1 + $0x18] sm:$0xff]
  %v101 = vld [vmem:[%s1 + $0x20] sm:$0xff]
  %v102 = vld [vmem:[%s1 + $0x28] sm:$0xff]
  %v103 = vld [vmem:[%s1 + $0x30] sm:$0xff]
  %v104 = vld [vmem:[%s1 + $0x38] sm:$0xff]
  %v105 = vld [vmem:[%s1 + $0x40] sm:$0xff]
  %v106 = vld [vmem:[%s2] sm:$0xff]
  %108 = vset.pattern.permute.xlu0 0
  %109 = vperm.xlu0 %108, %v106
  %v110 = vpop.permute.xlu0 %109
  %vm112 = vcmask 64512
  %v114 = vsel %vm112, %v101, 0
  %116 = vmatprep.subr.mxu0 0.0
  %117 = vmatpush1.msra.mxu0 0.0
  %118 = vmatprep.subr.mxu0 0.0
  %119 = vmatpush1.msra.mxu0 0.0
  %120 = vmatprep.subr.mxu0 0.0
  %121 = vmatpush1.msra.mxu0 0.0
  %122 = vmatprep.subr.mxu0 0.0
  %123 = vmatpush1.msra.mxu0 0.0
  %124 = vmatprep.subr.mxu0 0.0
  %125 = vmatpush1.msra.mxu0 0.0
  %126 = vmatprep.subr.mxu0 0.0
  %127 = vmatpush1.msra.mxu0 0.0
  %128 = vmatprep.subr.mxu0 0.0
  %129 = vmatpush1.msra.mxu0 0.0
  %130 = vmatprep.subr.mxu0 0.0
  %131 = vmatpush1.msra.mxu0 0.0
  %132 = vmatprep.subr.mxu0 0.0
  %133 = vmatpush1.msra.mxu0 0.0
  %134 = vmatprep.subr.mxu0 0.0
  %135 = vmatpush1.msra.mxu0 0.0
  %136 = vmatprep.subr.mxu0 0.0
  %137 = vmatpush1.msra.mxu0 0.0
  %138 = vmatprep.subr.mxu0 0.0
  %139 = vmatpush1.msra.mxu0 0.0
  %140 = vmatprep.subr.mxu0 0.0
  %141 = vmatpush1.msra.mxu0 0.0
  %142 = vmatprep.subr.mxu0 0.0
  %143 = vmatpush1.msra.mxu0 0.0
  %144 = vmatprep.subr.mxu0 0.0
  %145 = vmatpush1.msra.mxu0 0.0
  %146 = vmatprep.subr.mxu0 %v21
  %147 = vmatpush1.msra.mxu0 %v20
  %148 = vmatprep.subr.mxu0 0.0
  %149 = vmatpush2.msra.mxu0 0.0
  %150 = vmatprep.subr.mxu0 0.0
  %151 = vmatpush2.msra.mxu0 0.0
  %152 = vmatprep.subr.mxu0 0.0
  %153 = vmatpush2.msra.mxu0 0.0
  %154 = vmatprep.subr.mxu0 0.0
  %155 = vmatpush2.msra.mxu0 0.0
  %156 = vmatprep.subr.mxu0 0.0
  %157 = vmatpush2.msra.mxu0 0.0
  %158 = vmatprep.subr.mxu0 0.0
  %159 = vmatpush2.msra.mxu0 0.0
  %160 = vmatprep.subr.mxu0 0.0
  %161 = vmatpush2.msra.mxu0 0.0
  %162 = vmatprep.subr.mxu0 0.0
  %163 = vmatpush2.msra.mxu0 0.0
  %164 = vmatprep.subr.mxu0 0.0
  %165 = vmatpush2.msra.mxu0 0.0
  %166 = vmatprep.subr.mxu0 0.0
  %167 = vmatpush2.msra.mxu0 0.0
  %168 = vmatprep.subr.mxu0 0.0
  %169 = vmatpush2.msra.mxu0 0.0
  %170 = vmatprep.subr.mxu0 0.0
  %171 = vmatpush2.msra.mxu0 0.0
  %172 = vmatprep.subr.mxu0 0.0
  %173 = vmatpush2.msra.mxu0 0.0
  %174 = vmatprep.subr.mxu0 0.0
  %175 = vmatpush2.msra.mxu0 0.0
  %176 = vmatprep.subr.mxu0 0.0
  %177 = vmatpush2.msra.mxu0 0.0
  %178 = vmatprep.subr.mxu0 0.0
  %179 = vmatpush2.msra.mxu0 0.0
  %180 = vmatprep.mubr.f32.mxu0 0.0
  %181 = vmatmul.mubr.f32.gmra.mxu0 %v114
  %v182 = vpop.f32.mrf.mxu0
  %v183 = vadd.f32 %v110, %v182
  %v184 = vpop.f32.mrf.mxu0
  %v185 = vadd.f32 %v110, %v184
  %186 = vdwg.mxu0
  %187 = vrot.lane.b32.xlu0 %v20, 17
  %v188 = vpop.permute.xlu0 %187
  %189 = vrot.lane.b32.xlu0 %v21, 17
  %v190 = vpop.permute.xlu0 %189
  %vm191 = vcmp.lt.s32.totalorder %v23, 17
  %v192 = vsel %vm191, %v188, %v190
  %v193 = vsel %vm191, %v190, %v188
  %v194 = vsel %vm61, %v193, 0.0
  %v195 = vsel %vm62, %v192, 0.0
  %v197 = vsel %vm112, %v97, 0
  %199 = vmatprep.subr.mxu0 0.0
  %200 = vmatpush1.msra.mxu0 0.0
  %201 = vmatprep.subr.mxu0 0.0
  %202 = vmatpush1.msra.mxu0 0.0
  %203 = vmatprep.subr.mxu0 0.0
  %204 = vmatpush1.msra.mxu0 0.0
  %205 = vmatprep.subr.mxu0 0.0
  %206 = vmatpush1.msra.mxu0 0.0
  %207 = vmatprep.subr.mxu0 0.0
  %208 = vmatpush1.msra.mxu0 0.0
  %209 = vmatprep.subr.mxu0 0.0
  %210 = vmatpush1.msra.mxu0 0.0
  %211 = vmatprep.subr.mxu0 0.0
  %212 = vmatpush1.msra.mxu0 0.0
  %213 = vmatprep.subr.mxu0 0.0
  %214 = vmatpush1.msra.mxu0 0.0
  %215 = vmatprep.subr.mxu0 0.0
  %216 = vmatpush1.msra.mxu0 0.0
  %217 = vmatprep.subr.mxu0 0.0
  %218 = vmatpush1.msra.mxu0 0.0
  %219 = vmatprep.subr.mxu0 0.0
  %220 = vmatpush1.msra.mxu0 0.0
  %221 = vmatprep.subr.mxu0 0.0
  %222 = vmatpush1.msra.mxu0 0.0
  %223 = vmatprep.subr.mxu0 0.0
  %224 = vmatpush1.msra.mxu0 0.0
  %225 = vmatprep.subr.mxu0 0.0
  %226 = vmatpush1.msra.mxu0 0.0
  %227 = vmatprep.subr.mxu0 0.0
  %228 = vmatpush1.msra.mxu0 0.0
  %229 = vmatprep.subr.mxu0 %v195
  %230 = vmatpush1.msra.mxu0 %v194
  %231 = vmatprep.subr.mxu0 0.0
  %232 = vmatpush2.msra.mxu0 0.0
  %233 = vmatprep.subr.mxu0 0.0
  %234 = vmatpush2.msra.mxu0 0.0
  %235 = vmatprep.subr.mxu0 0.0
  %236 = vmatpush2.msra.mxu0 0.0
  %237 = vmatprep.subr.mxu0 0.0
  %238 = vmatpush2.msra.mxu0 0.0
  %239 = vmatprep.subr.mxu0 0.0
  %240 = vmatpush2.msra.mxu0 0.0
  %241 = vmatprep.subr.mxu0 0.0
  %242 = vmatpush2.msra.mxu0 0.0
  %243 = vmatprep.subr.mxu0 0.0
  %244 = vmatpush2.msra.mxu0 0.0
  %245 = vmatprep.subr.mxu0 0.0
  %246 = vmatpush2.msra.mxu0 0.0
  %247 = vmatprep.subr.mxu0 0.0
  %248 = vmatpush2.msra.mxu0 0.0
  %249 = vmatprep.subr.mxu0 0.0
  %250 = vmatpush2.msra.mxu0 0.0
  %251 = vmatprep.subr.mxu0 0.0
  %252 = vmatpush2.msra.mxu0 0.0
  %253 = vmatprep.subr.mxu0 0.0
  %254 = vmatpush2.msra.mxu0 0.0
  %255 = vmatprep.subr.mxu0 0.0
  %256 = vmatpush2.msra.mxu0 0.0
  %257 = vmatprep.subr.mxu0 0.0
  %258 = vmatpush2.msra.mxu0 0.0
  %259 = vmatprep.subr.mxu0 0.0
  %260 = vmatpush2.msra.mxu0 0.0
  %261 = vmatprep.subr.mxu0 0.0
  %262 = vmatpush2.msra.mxu0 0.0
  %263 = vmatprep.mubr.f32.mxu0 0.0
  %264 = vmatmul.mubr.f32.gmra.mxu0 %v197
  %v265 = vpop.f32.mrf.mxu0
  %v266 = vadd.f32 0.0, %v265
  %v267 = vpop.f32.mrf.mxu0
  %v268 = vadd.f32 0.0, %v267
  %269 = vdwg.mxu0
  %v270 = vadd.f32 %v183, %v266
  %v271 = vadd.f32 %v185, %v268
  %272 = vrot.lane.b32.xlu0 %v20, 16
  %v273 = vpop.permute.xlu0 %272
  %274 = vrot.lane.b32.xlu0 %v21, 16
  %v275 = vpop.permute.xlu0 %274
  %vm276 = vcmp.lt.s32.totalorder %v23, 16
  %v277 = vsel %vm276, %v273, %v275
  %v278 = vsel %vm276, %v275, %v273
  %v279 = vsel %vm65, %v278, 0.0
  %v280 = vsel %vm66, %v277, 0.0
  %v282 = vsel %vm112, %v98, 0
  %284 = vmatprep.subr.mxu0 0.0
  %285 = vmatpush1.msra.mxu0 0.0
  %286 = vmatprep.subr.mxu0 0.0
  %287 = vmatpush1.msra.mxu0 0.0
  %288 = vmatprep.subr.mxu0 0.0
  %289 = vmatpush1.msra.mxu0 0.0
  %290 = vmatprep.subr.mxu0 0.0
  %291 = vmatpush1.msra.mxu0 0.0
  %292 = vmatprep.subr.mxu0 0.0
  %293 = vmatpush1.msra.mxu0 0.0
  %294 = vmatprep.subr.mxu0 0.0
  %295 = vmatpush1.msra.mxu0 0.0
  %296 = vmatprep.subr.mxu0 0.0
  %297 = vmatpush1.msra.mxu0 0.0
  %298 = vmatprep.subr.mxu0 0.0
  %299 = vmatpush1.msra.mxu0 0.0
  %300 = vmatprep.subr.mxu0 0.0
  %301 = vmatpush1.msra.mxu0 0.0
  %302 = vmatprep.subr.mxu0 0.0
  %303 = vmatpush1.msra.mxu0 0.0
  %304 = vmatprep.subr.mxu0 0.0
  %305 = vmatpush1.msra.mxu0 0.0
  %306 = vmatprep.subr.mxu0 0.0
  %307 = vmatpush1.msra.mxu0 0.0
  %308 = vmatprep.subr.mxu0 0.0
  %309 = vmatpush1.msra.mxu0 0.0
  %310 = vmatprep.subr.mxu0 0.0
  %311 = vmatpush1.msra.mxu0 0.0
  %312 = vmatprep.subr.mxu0 0.0
  %313 = vmatpush1.msra.mxu0 0.0
  %314 = vmatprep.subr.mxu0 %v280
  %315 = vmatpush1.msra.mxu0 %v279
  %316 = vmatprep.subr.mxu0 0.0
  %317 = vmatpush2.msra.mxu0 0.0
  %318 = vmatprep.subr.mxu0 0.0
  %319 = vmatpush2.msra.mxu0 0.0
  %320 = vmatprep.subr.mxu0 0.0
  %321 = vmatpush2.msra.mxu0 0.0
  %322 = vmatprep.subr.mxu0 0.0
  %323 = vmatpush2.msra.mxu0 0.0
  %324 = vmatprep.subr.mxu0 0.0
  %325 = vmatpush2.msra.mxu0 0.0
  %326 = vmatprep.subr.mxu0 0.0
  %327 = vmatpush2.msra.mxu0 0.0
  %328 = vmatprep.subr.mxu0 0.0
  %329 = vmatpush2.msra.mxu0 0.0
  %330 = vmatprep.subr.mxu0 0.0
  %331 = vmatpush2.msra.mxu0 0.0
  %332 = vmatprep.subr.mxu0 0.0
  %333 = vmatpush2.msra.mxu0 0.0
  %334 = vmatprep.subr.mxu0 0.0
  %335 = vmatpush2.msra.mxu0 0.0
  %336 = vmatprep.subr.mxu0 0.0
  %337 = vmatpush2.msra.mxu0 0.0
  %338 = vmatprep.subr.mxu0 0.0
  %339 = vmatpush2.msra.mxu0 0.0
  %340 = vmatprep.subr.mxu0 0.0
  %341 = vmatpush2.msra.mxu0 0.0
  %342 = vmatprep.subr.mxu0 0.0
  %343 = vmatpush2.msra.mxu0 0.0
  %344 = vmatprep.subr.mxu0 0.0
  %345 = vmatpush2.msra.mxu0 0.0
  %346 = vmatprep.subr.mxu0 0.0
  %347 = vmatpush2.msra.mxu0 0.0
  %348 = vmatprep.mubr.f32.mxu0 0.0
  %349 = vmatmul.mubr.f32.gmra.mxu0 %v282
  %v350 = vpop.f32.mrf.mxu0
  %v351 = vadd.f32 0.0, %v350
  %v352 = vpop.f32.mrf.mxu0
  %v353 = vadd.f32 0.0, %v352
  %354 = vdwg.mxu0
  %v355 = vadd.f32 %v270, %v351
  %v356 = vadd.f32 %v271, %v353
  %357 = vrot.lane.b32.xlu0 %v20, 15
  %v358 = vpop.permute.xlu0 %357
  %359 = vrot.lane.b32.xlu0 %v21, 15
  %v360 = vpop.permute.xlu0 %359
  %vm361 = vcmp.lt.s32.totalorder %v23, 15
  %v362 = vsel %vm361, %v358, %v360
  %v363 = vsel %vm361, %v360, %v358
  %v364 = vsel %vm71, %v363, 0.0
  %v365 = vsel %vm72, %v362, 0.0
  %v367 = vsel %vm112, %v99, 0
  %369 = vmatprep.subr.mxu0 0.0
  %370 = vmatpush1.msra.mxu0 0.0
  %371 = vmatprep.subr.mxu0 0.0
  %372 = vmatpush1.msra.mxu0 0.0
  %373 = vmatprep.subr.mxu0 0.0
  %374 = vmatpush1.msra.mxu0 0.0
  %375 = vmatprep.subr.mxu0 0.0
  %376 = vmatpush1.msra.mxu0 0.0
  %377 = vmatprep.subr.mxu0 0.0
  %378 = vmatpush1.msra.mxu0 0.0
  %379 = vmatprep.subr.mxu0 0.0
  %380 = vmatpush1.msra.mxu0 0.0
  %381 = vmatprep.subr.mxu0 0.0
  %382 = vmatpush1.msra.mxu0 0.0
  %383 = vmatprep.subr.mxu0 0.0
  %384 = vmatpush1.msra.mxu0 0.0
  %385 = vmatprep.subr.mxu0 0.0
  %386 = vmatpush1.msra.mxu0 0.0
  %387 = vmatprep.subr.mxu0 0.0
  %388 = vmatpush1.msra.mxu0 0.0
  %389 = vmatprep.subr.mxu0 0.0
  %390 = vmatpush1.msra.mxu0 0.0
  %391 = vmatprep.subr.mxu0 0.0
  %392 = vmatpush1.msra.mxu0 0.0
  %393 = vmatprep.subr.mxu0 0.0
  %394 = vmatpush1.msra.mxu0 0.0
  %395 = vmatprep.subr.mxu0 0.0
  %396 = vmatpush1.msra.mxu0 0.0
  %397 = vmatprep.subr.mxu0 0.0
  %398 = vmatpush1.msra.mxu0 0.0
  %399 = vmatprep.subr.mxu0 %v365
  %400 = vmatpush1.msra.mxu0 %v364
  %401 = vmatprep.subr.mxu0 0.0
  %402 = vmatpush2.msra.mxu0 0.0
  %403 = vmatprep.subr.mxu0 0.0
  %404 = vmatpush2.msra.mxu0 0.0
  %405 = vmatprep.subr.mxu0 0.0
  %406 = vmatpush2.msra.mxu0 0.0
  %407 = vmatprep.subr.mxu0 0.0
  %408 = vmatpush2.msra.mxu0 0.0
  %409 = vmatprep.subr.mxu0 0.0
  %410 = vmatpush2.msra.mxu0 0.0
  %411 = vmatprep.subr.mxu0 0.0
  %412 = vmatpush2.msra.mxu0 0.0
  %413 = vmatprep.subr.mxu0 0.0
  %414 = vmatpush2.msra.mxu0 0.0
  %415 = vmatprep.subr.mxu0 0.0
  %416 = vmatpush2.msra.mxu0 0.0
  %417 = vmatprep.subr.mxu0 0.0
  %418 = vmatpush2.msra.mxu0 0.0
  %419 = vmatprep.subr.mxu0 0.0
  %420 = vmatpush2.msra.mxu0 0.0
  %421 = vmatprep.subr.mxu0 0.0
  %422 = vmatpush2.msra.mxu0 0.0
  %423 = vmatprep.subr.mxu0 0.0
  %424 = vmatpush2.msra.mxu0 0.0
  %425 = vmatprep.subr.mxu0 0.0
  %426 = vmatpush2.msra.mxu0 0.0
  %427 = vmatprep.subr.mxu0 0.0
  %428 = vmatpush2.msra.mxu0 0.0
  %429 = vmatprep.subr.mxu0 0.0
  %430 = vmatpush2.msra.mxu0 0.0
  %431 = vmatprep.subr.mxu0 0.0
  %432 = vmatpush2.msra.mxu0 0.0
  %433 = vmatprep.mubr.f32.mxu0 0.0
  %434 = vmatmul.mubr.f32.gmra.mxu0 %v367
  %v435 = vpop.f32.mrf.mxu0
  %v436 = vadd.f32 0.0, %v435
  %v437 = vpop.f32.mrf.mxu0
  %v438 = vadd.f32 0.0, %v437
  %439 = vdwg.mxu0
  %v440 = vadd.f32 %v355, %v436
  %v441 = vadd.f32 %v356, %v438
  %442 = vrot.lane.b32.xlu0 %v20, 1
  %v443 = vpop.permute.xlu0 %442
  %444 = vrot.lane.b32.xlu0 %v21, 1
  %v445 = vpop.permute.xlu0 %444
  %vm446 = vcmp.lt.s32.totalorder %v23, 1
  %v447 = vsel %vm446, %v443, %v445
  %v448 = vsel %vm446, %v445, %v443
  %v449 = vsel %vm75, %v448, 0.0
  %v450 = vsel %vm76, %v447, 0.0
  %v452 = vsel %vm112, %v100, 0
  %454 = vmatprep.subr.mxu0 0.0
  %455 = vmatpush1.msra.mxu0 0.0
  %456 = vmatprep.subr.mxu0 0.0
  %457 = vmatpush1.msra.mxu0 0.0
  %458 = vmatprep.subr.mxu0 0.0
  %459 = vmatpush1.msra.mxu0 0.0
  %460 = vmatprep.subr.mxu0 0.0
  %461 = vmatpush1.msra.mxu0 0.0
  %462 = vmatprep.subr.mxu0 0.0
  %463 = vmatpush1.msra.mxu0 0.0
  %464 = vmatprep.subr.mxu0 0.0
  %465 = vmatpush1.msra.mxu0 0.0
  %466 = vmatprep.subr.mxu0 0.0
  %467 = vmatpush1.msra.mxu0 0.0
  %468 = vmatprep.subr.mxu0 0.0
  %469 = vmatpush1.msra.mxu0 0.0
  %470 = vmatprep.subr.mxu0 0.0
  %471 = vmatpush1.msra.mxu0 0.0
  %472 = vmatprep.subr.mxu0 0.0
  %473 = vmatpush1.msra.mxu0 0.0
  %474 = vmatprep.subr.mxu0 0.0
  %475 = vmatpush1.msra.mxu0 0.0
  %476 = vmatprep.subr.mxu0 0.0
  %477 = vmatpush1.msra.mxu0 0.0
  %478 = vmatprep.subr.mxu0 0.0
  %479 = vmatpush1.msra.mxu0 0.0
  %480 = vmatprep.subr.mxu0 0.0
  %481 = vmatpush1.msra.mxu0 0.0
  %482 = vmatprep.subr.mxu0 0.0
  %483 = vmatpush1.msra.mxu0 0.0
  %484 = vmatprep.subr.mxu0 %v450
  %485 = vmatpush1.msra.mxu0 %v449
  %486 = vmatprep.subr.mxu0 0.0
  %487 = vmatpush2.msra.mxu0 0.0
  %488 = vmatprep.subr.mxu0 0.0
  %489 = vmatpush2.msra.mxu0 0.0
  %490 = vmatprep.subr.mxu0 0.0
  %491 = vmatpush2.msra.mxu0 0.0
  %492 = vmatprep.subr.mxu0 0.0
  %493 = vmatpush2.msra.mxu0 0.0
  %494 = vmatprep.subr.mxu0 0.0
  %495 = vmatpush2.msra.mxu0 0.0
  %496 = vmatprep.subr.mxu0 0.0
  %497 = vmatpush2.msra.mxu0 0.0
  %498 = vmatprep.subr.mxu0 0.0
  %499 = vmatpush2.msra.mxu0 0.0
  %500 = vmatprep.subr.mxu0 0.0
  %501 = vmatpush2.msra.mxu0 0.0
  %502 = vmatprep.subr.mxu0 0.0
  %503 = vmatpush2.msra.mxu0 0.0
  %504 = vmatprep.subr.mxu0 0.0
  %505 = vmatpush2.msra.mxu0 0.0
  %506 = vmatprep.subr.mxu0 0.0
  %507 = vmatpush2.msra.mxu0 0.0
  %508 = vmatprep.subr.mxu0 0.0
  %509 = vmatpush2.msra.mxu0 0.0
  %510 = vmatprep.subr.mxu0 0.0
  %511 = vmatpush2.msra.mxu0 0.0
  %512 = vmatprep.subr.mxu0 0.0
  %513 = vmatpush2.msra.mxu0 0.0
  %514 = vmatprep.subr.mxu0 0.0
  %515 = vmatpush2.msra.mxu0 0.0
  %516 = vmatprep.subr.mxu0 0.0
  %517 = vmatpush2.msra.mxu0 0.0
  %518 = vmatprep.mubr.f32.mxu0 0.0
  %519 = vmatmul.mubr.f32.gmra.mxu0 %v452
  %v520 = vpop.f32.mrf.mxu0
  %v521 = vadd.f32 0.0, %v520
  %v522 = vpop.f32.mrf.mxu0
  %v523 = vadd.f32 0.0, %v522
  %524 = vdwg.mxu0
  %v525 = vadd.f32 %v440, %v521
  %v526 = vadd.f32 %v441, %v523
  %527 = vrot.lane.b32.xlu0 %v20, 127
  %v528 = vpop.permute.xlu0 %527
  %529 = vrot.lane.b32.xlu0 %v21, 127
  %v530 = vpop.permute.xlu0 %529
  %vm531 = vcmp.lt.s32.totalorder %v23, 127
  %v532 = vsel %vm531, %v528, %v530
  %v533 = vsel %vm531, %v530, %v528
  %v534 = vsel %vm79, %v532, 0.0
  %v535 = vsel %vm80, %v533, 0.0
  %v537 = vsel %vm112, %v102, 0
  %539 = vmatprep.subr.mxu0 0.0
  %540 = vmatpush1.msra.mxu0 0.0
  %541 = vmatprep.subr.mxu0 0.0
  %542 = vmatpush1.msra.mxu0 0.0
  %543 = vmatprep.subr.mxu0 0.0
  %544 = vmatpush1.msra.mxu0 0.0
  %545 = vmatprep.subr.mxu0 0.0
  %546 = vmatpush1.msra.mxu0 0.0
  %547 = vmatprep.subr.mxu0 0.0
  %548 = vmatpush1.msra.mxu0 0.0
  %549 = vmatprep.subr.mxu0 0.0
  %550 = vmatpush1.msra.mxu0 0.0
  %551 = vmatprep.subr.mxu0 0.0
  %552 = vmatpush1.msra.mxu0 0.0
  %553 = vmatprep.subr.mxu0 0.0
  %554 = vmatpush1.msra.mxu0 0.0
  %555 = vmatprep.subr.mxu0 0.0
  %556 = vmatpush1.msra.mxu0 0.0
  %557 = vmatprep.subr.mxu0 0.0
  %558 = vmatpush1.msra.mxu0 0.0
  %559 = vmatprep.subr.mxu0 0.0
  %560 = vmatpush1.msra.mxu0 0.0
  %561 = vmatprep.subr.mxu0 0.0
  %562 = vmatpush1.msra.mxu0 0.0
  %563 = vmatprep.subr.mxu0 0.0
  %564 = vmatpush1.msra.mxu0 0.0
  %565 = vmatprep.subr.mxu0 0.0
  %566 = vmatpush1.msra.mxu0 0.0
  %567 = vmatprep.subr.mxu0 0.0
  %568 = vmatpush1.msra.mxu0 0.0
  %569 = vmatprep.subr.mxu0 %v535
  %570 = vmatpush1.msra.mxu0 %v534
  %571 = vmatprep.subr.mxu0 0.0
  %572 = vmatpush2.msra.mxu0 0.0
  %573 = vmatprep.subr.mxu0 0.0
  %574 = vmatpush2.msra.mxu0 0.0
  %575 = vmatprep.subr.mxu0 0.0
  %576 = vmatpush2.msra.mxu0 0.0
  %577 = vmatprep.subr.mxu0 0.0
  %578 = vmatpush2.msra.mxu0 0.0
  %579 = vmatprep.subr.mxu0 0.0
  %580 = vmatpush2.msra.mxu0 0.0
  %581 = vmatprep.subr.mxu0 0.0
  %582 = vmatpush2.msra.mxu0 0.0
  %583 = vmatprep.subr.mxu0 0.0
  %584 = vmatpush2.msra.mxu0 0.0
  %585 = vmatprep.subr.mxu0 0.0
  %586 = vmatpush2.msra.mxu0 0.0
  %587 = vmatprep.subr.mxu0 0.0
  %588 = vmatpush2.msra.mxu0 0.0
  %589 = vmatprep.subr.mxu0 0.0
  %590 = vmatpush2.msra.mxu0 0.0
  %591 = vmatprep.subr.mxu0 0.0
  %592 = vmatpush2.msra.mxu0 0.0
  %593 = vmatprep.subr.mxu0 0.0
  %594 = vmatpush2.msra.mxu0 0.0
  %595 = vmatprep.subr.mxu0 0.0
  %596 = vmatpush2.msra.mxu0 0.0
  %597 = vmatprep.subr.mxu0 0.0
  %598 = vmatpush2.msra.mxu0 0.0
  %599 = vmatprep.subr.mxu0 0.0
  %600 = vmatpush2.msra.mxu0 0.0
  %601 = vmatprep.subr.mxu0 0.0
  %602 = vmatpush2.msra.mxu0 0.0
  %603 = vmatprep.mubr.f32.mxu0 0.0
  %604 = vmatmul.mubr.f32.gmra.mxu0 %v537
  %v605 = vpop.f32.mrf.mxu0
  %v606 = vadd.f32 0.0, %v605
  %v607 = vpop.f32.mrf.mxu0
  %v608 = vadd.f32 0.0, %v607
  %609 = vdwg.mxu0
  %v610 = vadd.f32 %v525, %v606
  %v611 = vadd.f32 %v526, %v608
  %612 = vrot.lane.b32.xlu0 %v20, 113
  %v613 = vpop.permute.xlu0 %612
  %614 = vrot.lane.b32.xlu0 %v21, 113
  %v615 = vpop.permute.xlu0 %614
  %vm616 = vcmp.lt.s32.totalorder %v23, 113
  %v617 = vsel %vm616, %v613, %v615
  %v618 = vsel %vm616, %v615, %v613
  %v619 = vsel %vm85, %v617, 0.0
  %v620 = vsel %vm86, %v618, 0.0
  %v622 = vsel %vm112, %v103, 0
  %624 = vmatprep.subr.mxu0 0.0
  %625 = vmatpush1.msra.mxu0 0.0
  %626 = vmatprep.subr.mxu0 0.0
  %627 = vmatpush1.msra.mxu0 0.0
  %628 = vmatprep.subr.mxu0 0.0
  %629 = vmatpush1.msra.mxu0 0.0
  %630 = vmatprep.subr.mxu0 0.0
  %631 = vmatpush1.msra.mxu0 0.0
  %632 = vmatprep.subr.mxu0 0.0
  %633 = vmatpush1.msra.mxu0 0.0
  %634 = vmatprep.subr.mxu0 0.0
  %635 = vmatpush1.msra.mxu0 0.0
  %636 = vmatprep.subr.mxu0 0.0
  %637 = vmatpush1.msra.mxu0 0.0
  %638 = vmatprep.subr.mxu0 0.0
  %639 = vmatpush1.msra.mxu0 0.0
  %640 = vmatprep.subr.mxu0 0.0
  %641 = vmatpush1.msra.mxu0 0.0
  %642 = vmatprep.subr.mxu0 0.0
  %643 = vmatpush1.msra.mxu0 0.0
  %644 = vmatprep.subr.mxu0 0.0
  %645 = vmatpush1.msra.mxu0 0.0
  %646 = vmatprep.subr.mxu0 0.0
  %647 = vmatpush1.msra.mxu0 0.0
  %648 = vmatprep.subr.mxu0 0.0
  %649 = vmatpush1.msra.mxu0 0.0
  %650 = vmatprep.subr.mxu0 0.0
  %651 = vmatpush1.msra.mxu0 0.0
  %652 = vmatprep.subr.mxu0 0.0
  %653 = vmatpush1.msra.mxu0 0.0
  %654 = vmatprep.subr.mxu0 %v620
  %655 = vmatpush1.msra.mxu0 %v619
  %656 = vmatprep.subr.mxu0 0.0
  %657 = vmatpush2.msra.mxu0 0.0
  %658 = vmatprep.subr.mxu0 0.0
  %659 = vmatpush2.msra.mxu0 0.0
  %660 = vmatprep.subr.mxu0 0.0
  %661 = vmatpush2.msra.mxu0 0.0
  %662 = vmatprep.subr.mxu0 0.0
  %663 = vmatpush2.msra.mxu0 0.0
  %664 = vmatprep.subr.mxu0 0.0
  %665 = vmatpush2.msra.mxu0 0.0
  %666 = vmatprep.subr.mxu0 0.0
  %667 = vmatpush2.msra.mxu0 0.0
  %668 = vmatprep.subr.mxu0 0.0
  %669 = vmatpush2.msra.mxu0 0.0
  %670 = vmatprep.subr.mxu0 0.0
  %671 = vmatpush2.msra.mxu0 0.0
  %672 = vmatprep.subr.mxu0 0.0
  %673 = vmatpush2.msra.mxu0 0.0
  %674 = vmatprep.subr.mxu0 0.0
  %675 = vmatpush2.msra.mxu0 0.0
  %676 = vmatprep.subr.mxu0 0.0
  %677 = vmatpush2.msra.mxu0 0.0
  %678 = vmatprep.subr.mxu0 0.0
  %679 = vmatpush2.msra.mxu0 0.0
  %680 = vmatprep.subr.mxu0 0.0
  %681 = vmatpush2.msra.mxu0 0.0
  %682 = vmatprep.subr.mxu0 0.0
  %683 = vmatpush2.msra.mxu0 0.0
  %684 = vmatprep.subr.mxu0 0.0
  %685 = vmatpush2.msra.mxu0 0.0
  %686 = vmatprep.subr.mxu0 0.0
  %687 = vmatpush2.msra.mxu0 0.0
  %688 = vmatprep.mubr.f32.mxu0 0.0
  %689 = vmatmul.mubr.f32.gmra.mxu0 %v622
  %v690 = vpop.f32.mrf.mxu0
  %v691 = vadd.f32 0.0, %v690
  %v692 = vpop.f32.mrf.mxu0
  %v693 = vadd.f32 0.0, %v692
  %694 = vdwg.mxu0
  %v695 = vadd.f32 %v610, %v691
  %v696 = vadd.f32 %v611, %v693
  %697 = vrot.lane.b32.xlu0 %v20, 112
  %v698 = vpop.permute.xlu0 %697
  %699 = vrot.lane.b32.xlu0 %v21, 112
  %v700 = vpop.permute.xlu0 %699
  %vm701 = vcmp.lt.s32.totalorder %v23, 112
  %v702 = vsel %vm701, %v698, %v700
  %v703 = vsel %vm701, %v700, %v698
  %v704 = vsel %vm89, %v702, 0.0
  %v705 = vsel %vm90, %v703, 0.0
  %v707 = vsel %vm112, %v104, 0
  %709 = vmatprep.subr.mxu0 0.0
  %710 = vmatpush1.msra.mxu0 0.0
  %711 = vmatprep.subr.mxu0 0.0
  %712 = vmatpush1.msra.mxu0 0.0
  %713 = vmatprep.subr.mxu0 0.0
  %714 = vmatpush1.msra.mxu0 0.0
  %715 = vmatprep.subr.mxu0 0.0
  %716 = vmatpush1.msra.mxu0 0.0
  %717 = vmatprep.subr.mxu0 0.0
  %718 = vmatpush1.msra.mxu0 0.0
  %719 = vmatprep.subr.mxu0 0.0
  %720 = vmatpush1.msra.mxu0 0.0
  %721 = vmatprep.subr.mxu0 0.0
  %722 = vmatpush1.msra.mxu0 0.0
  %723 = vmatprep.subr.mxu0 0.0
  %724 = vmatpush1.msra.mxu0 0.0
  %725 = vmatprep.subr.mxu0 0.0
  %726 = vmatpush1.msra.mxu0 0.0
  %727 = vmatprep.subr.mxu0 0.0
  %728 = vmatpush1.msra.mxu0 0.0
  %729 = vmatprep.subr.mxu0 0.0
  %730 = vmatpush1.msra.mxu0 0.0
  %731 = vmatprep.subr.mxu0 0.0
  %732 = vmatpush1.msra.mxu0 0.0
  %733 = vmatprep.subr.mxu0 0.0
  %734 = vmatpush1.msra.mxu0 0.0
  %735 = vmatprep.subr.mxu0 0.0
  %736 = vmatpush1.msra.mxu0 0.0
  %737 = vmatprep.subr.mxu0 0.0
  %738 = vmatpush1.msra.mxu0 0.0
  %739 = vmatprep.subr.mxu0 %v705
  %740 = vmatpush1.msra.mxu0 %v704
  %741 = vmatprep.subr.mxu0 0.0
  %742 = vmatpush2.msra.mxu0 0.0
  %743 = vmatprep.subr.mxu0 0.0
  %744 = vmatpush2.msra.mxu0 0.0
  %745 = vmatprep.subr.mxu0 0.0
  %746 = vmatpush2.msra.mxu0 0.0
  %747 = vmatprep.subr.mxu0 0.0
  %748 = vmatpush2.msra.mxu0 0.0
  %749 = vmatprep.subr.mxu0 0.0
  %750 = vmatpush2.msra.mxu0 0.0
  %751 = vmatprep.subr.mxu0 0.0
  %752 = vmatpush2.msra.mxu0 0.0
  %753 = vmatprep.subr.mxu0 0.0
  %754 = vmatpush2.msra.mxu0 0.0
  %755 = vmatprep.subr.mxu0 0.0
  %756 = vmatpush2.msra.mxu0 0.0
  %757 = vmatprep.subr.mxu0 0.0
  %758 = vmatpush2.msra.mxu0 0.0
  %759 = vmatprep.subr.mxu0 0.0
  %760 = vmatpush2.msra.mxu0 0.0
  %761 = vmatprep.subr.mxu0 0.0
  %762 = vmatpush2.msra.mxu0 0.0
  %763 = vmatprep.subr.mxu0 0.0
  %764 = vmatpush2.msra.mxu0 0.0
  %765 = vmatprep.subr.mxu0 0.0
  %766 = vmatpush2.msra.mxu0 0.0
  %767 = vmatprep.subr.mxu0 0.0
  %768 = vmatpush2.msra.mxu0 0.0
  %769 = vmatprep.subr.mxu0 0.0
  %770 = vmatpush2.msra.mxu0 0.0
  %771 = vmatprep.subr.mxu0 0.0
  %772 = vmatpush2.msra.mxu0 0.0
  %773 = vmatprep.mubr.f32.mxu0 0.0
  %774 = vmatmul.mubr.f32.gmra.mxu0 %v707
  %v775 = vpop.f32.mrf.mxu0
  %v776 = vadd.f32 0.0, %v775
  %v777 = vpop.f32.mrf.mxu0
  %v778 = vadd.f32 0.0, %v777
  %779 = vdwg.mxu0
  %v780 = vadd.f32 %v695, %v776
  %v781 = vadd.f32 %v696, %v778
  %782 = vrot.lane.b32.xlu0 %v20, 111
  %v783 = vpop.permute.xlu0 %782
  %784 = vrot.lane.b32.xlu0 %v21, 111
  %v785 = vpop.permute.xlu0 %784
  %vm786 = vcmp.lt.s32.totalorder %v23, 111
  %v787 = vsel %vm786, %v783, %v785
  %v788 = vsel %vm786, %v785, %v783
  %v789 = vsel %vm95, %v787, 0.0
  %v790 = vsel %vm96, %v788, 0.0
  %v792 = vsel %vm112, %v105, 0
  %794 = vmatprep.subr.mxu0 0.0
  %795 = vmatpush1.msra.mxu0 0.0
  %796 = vmatprep.subr.mxu0 0.0
  %797 = vmatpush1.msra.mxu0 0.0
  %798 = vmatprep.subr.mxu0 0.0
  %799 = vmatpush1.msra.mxu0 0.0
  %800 = vmatprep.subr.mxu0 0.0
  %801 = vmatpush1.msra.mxu0 0.0
  %802 = vmatprep.subr.mxu0 0.0
  %803 = vmatpush1.msra.mxu0 0.0
  %804 = vmatprep.subr.mxu0 0.0
  %805 = vmatpush1.msra.mxu0 0.0
  %806 = vmatprep.subr.mxu0 0.0
  %807 = vmatpush1.msra.mxu0 0.0
  %808 = vmatprep.subr.mxu0 0.0
  %809 = vmatpush1.msra.mxu0 0.0
  %810 = vmatprep.subr.mxu0 0.0
  %811 = vmatpush1.msra.mxu0 0.0
  %812 = vmatprep.subr.mxu0 0.0
  %813 = vmatpush1.msra.mxu0 0.0
  %814 = vmatprep.subr.mxu0 0.0
  %815 = vmatpush1.msra.mxu0 0.0
  %816 = vmatprep.subr.mxu0 0.0
  %817 = vmatpush1.msra.mxu0 0.0
  %818 = vmatprep.subr.mxu0 0.0
  %819 = vmatpush1.msra.mxu0 0.0
  %820 = vmatprep.subr.mxu0 0.0
  %821 = vmatpush1.msra.mxu0 0.0
  %822 = vmatprep.subr.mxu0 0.0
  %823 = vmatpush1.msra.mxu0 0.0
  %824 = vmatprep.subr.mxu0 %v790
  %825 = vmatpush1.msra.mxu0 %v789
  %826 = vmatprep.subr.mxu0 0.0
  %827 = vmatpush2.msra.mxu0 0.0
  %828 = vmatprep.subr.mxu0 0.0
  %829 = vmatpush2.msra.mxu0 0.0
  %830 = vmatprep.subr.mxu0 0.0
  %831 = vmatpush2.msra.mxu0 0.0
  %832 = vmatprep.subr.mxu0 0.0
  %833 = vmatpush2.msra.mxu0 0.0
  %834 = vmatprep.subr.mxu0 0.0
  %835 = vmatpush2.msra.mxu0 0.0
  %836 = vmatprep.subr.mxu0 0.0
  %837 = vmatpush2.msra.mxu0 0.0
  %838 = vmatprep.subr.mxu0 0.0
  %839 = vmatpush2.msra.mxu0 0.0
  %840 = vmatprep.subr.mxu0 0.0
  %841 = vmatpush2.msra.mxu0 0.0
  %842 = vmatprep.subr.mxu0 0.0
  %843 = vmatpush2.msra.mxu0 0.0
  %844 = vmatprep.subr.mxu0 0.0
  %845 = vmatpush2.msra.mxu0 0.0
  %846 = vmatprep.subr.mxu0 0.0
  %847 = vmatpush2.msra.mxu0 0.0
  %848 = vmatprep.subr.mxu0 0.0
  %849 = vmatpush2.msra.mxu0 0.0
  %850 = vmatprep.subr.mxu0 0.0
  %851 = vmatpush2.msra.mxu0 0.0
  %852 = vmatprep.subr.mxu0 0.0
  %853 = vmatpush2.msra.mxu0 0.0
  %854 = vmatprep.subr.mxu0 0.0
  %855 = vmatpush2.msra.mxu0 0.0
  %856 = vmatprep.subr.mxu0 0.0
  %857 = vmatpush2.msra.mxu0 0.0
  %858 = vmatprep.mubr.f32.mxu0 0.0
  %859 = vmatmul.mubr.f32.gmra.mxu0 %v792
  %v860 = vpop.f32.mrf.mxu0
  %v861 = vadd.f32 0.0, %v860
  %v862 = vpop.f32.mrf.mxu0
  %v863 = vadd.f32 0.0, %v862
  %864 = vdwg.mxu0
  %v865 = vadd.f32 %v780, %v861
  %v866 = vadd.f32 %v781, %v863
  %v867 = vmax.f32 %v865, 0.0
  %v868 = vmax.f32 %v866, 0.0
  %v869 = vld [vmem:[%s3] sm:$0xff]
  %v870 = vld [vmem:[%s3 + $0x8] sm:$0xff]
  %v871 = vld [vmem:[%s3 + $0x10] sm:$0xff]
  %v872 = vld [vmem:[%s3 + $0x18] sm:$0xff]
  %v873 = vld [vmem:[%s3 + $0x20] sm:$0xff]
  %v874 = vld [vmem:[%s3 + $0x28] sm:$0xff]
  %v875 = vld [vmem:[%s3 + $0x30] sm:$0xff]
  %v876 = vld [vmem:[%s3 + $0x38] sm:$0xff]
  %v877 = vld [vmem:[%s3 + $0x40] sm:$0xff]
  %v878 = vld [vmem:[%s4] sm:$0xff]
  %880 = vset.pattern.permute.xlu0 0
  %881 = vperm.xlu0 %880, %v878
  %v882 = vpop.permute.xlu0 %881
  %v885 = vsel %vm112, %v873, 0
  %887 = vmatprep.subr.mxu0 0.0
  %888 = vmatpush1.msra.mxu0 0.0
  %889 = vmatprep.subr.mxu0 0.0
  %890 = vmatpush1.msra.mxu0 0.0
  %891 = vmatprep.subr.mxu0 0.0
  %892 = vmatpush1.msra.mxu0 0.0
  %893 = vmatprep.subr.mxu0 0.0
  %894 = vmatpush1.msra.mxu0 0.0
  %895 = vmatprep.subr.mxu0 0.0
  %896 = vmatpush1.msra.mxu0 0.0
  %897 = vmatprep.subr.mxu0 0.0
  %898 = vmatpush1.msra.mxu0 0.0
  %899 = vmatprep.subr.mxu0 0.0
  %900 = vmatpush1.msra.mxu0 0.0
  %901 = vmatprep.subr.mxu0 0.0
  %902 = vmatpush1.msra.mxu0 0.0
  %903 = vmatprep.subr.mxu0 0.0
  %904 = vmatpush1.msra.mxu0 0.0
  %905 = vmatprep.subr.mxu0 0.0
  %906 = vmatpush1.msra.mxu0 0.0
  %907 = vmatprep.subr.mxu0 0.0
  %908 = vmatpush1.msra.mxu0 0.0
  %909 = vmatprep.subr.mxu0 0.0
  %910 = vmatpush1.msra.mxu0 0.0
  %911 = vmatprep.subr.mxu0 0.0
  %912 = vmatpush1.msra.mxu0 0.0
  %913 = vmatprep.subr.mxu0 0.0
  %914 = vmatpush1.msra.mxu0 0.0
  %915 = vmatprep.subr.mxu0 0.0
  %916 = vmatpush1.msra.mxu0 0.0
  %917 = vmatprep.subr.mxu0 %v868
  %918 = vmatpush1.msra.mxu0 %v867
  %919 = vmatprep.subr.mxu0 0.0
  %920 = vmatpush2.msra.mxu0 0.0
  %921 = vmatprep.subr.mxu0 0.0
  %922 = vmatpush2.msra.mxu0 0.0
  %923 = vmatprep.subr.mxu0 0.0
  %924 = vmatpush2.msra.mxu0 0.0
  %925 = vmatprep.subr.mxu0 0.0
  %926 = vmatpush2.msra.mxu0 0.0
  %927 = vmatprep.subr.mxu0 0.0
  %928 = vmatpush2.msra.mxu0 0.0
  %929 = vmatprep.subr.mxu0 0.0
  %930 = vmatpush2.msra.mxu0 0.0
  %931 = vmatprep.subr.mxu0 0.0
  %932 = vmatpush2.msra.mxu0 0.0
  %933 = vmatprep.subr.mxu0 0.0
  %934 = vmatpush2.msra.mxu0 0.0
  %935 = vmatprep.subr.mxu0 0.0
  %936 = vmatpush2.msra.mxu0 0.0
  %937 = vmatprep.subr.mxu0 0.0
  %938 = vmatpush2.msra.mxu0 0.0
  %939 = vmatprep.subr.mxu0 0.0
  %940 = vmatpush2.msra.mxu0 0.0
  %941 = vmatprep.subr.mxu0 0.0
  %942 = vmatpush2.msra.mxu0 0.0
  %943 = vmatprep.subr.mxu0 0.0
  %944 = vmatpush2.msra.mxu0 0.0
  %945 = vmatprep.subr.mxu0 0.0
  %946 = vmatpush2.msra.mxu0 0.0
  %947 = vmatprep.subr.mxu0 0.0
  %948 = vmatpush2.msra.mxu0 0.0
  %949 = vmatprep.subr.mxu0 0.0
  %950 = vmatpush2.msra.mxu0 0.0
  %951 = vmatprep.mubr.f32.mxu0 0.0
  %952 = vmatmul.mubr.f32.gmra.mxu0 %v885
  %v953 = vpop.f32.mrf.mxu0
  %v954 = vadd.f32 %v882, %v953
  %v955 = vpop.f32.mrf.mxu0
  %v956 = vadd.f32 %v882, %v955
  %957 = vdwg.mxu0
  %958 = vrot.lane.b32.xlu0 %v867, 17
  %v959 = vpop.permute.xlu0 %958
  %960 = vrot.lane.b32.xlu0 %v868, 17
  %v961 = vpop.permute.xlu0 %960
  %v962 = vsel %vm191, %v959, %v961
  %v963 = vsel %vm191, %v961, %v959
  %v964 = vsel %vm61, %v963, 0.0
  %v965 = vsel %vm62, %v962, 0.0
  %v967 = vsel %vm112, %v869, 0
  %969 = vmatprep.subr.mxu0 0.0
  %970 = vmatpush1.msra.mxu0 0.0
  %971 = vmatprep.subr.mxu0 0.0
  %972 = vmatpush1.msra.mxu0 0.0
  %973 = vmatprep.subr.mxu0 0.0
  %974 = vmatpush1.msra.mxu0 0.0
  %975 = vmatprep.subr.mxu0 0.0
  %976 = vmatpush1.msra.mxu0 0.0
  %977 = vmatprep.subr.mxu0 0.0
  %978 = vmatpush1.msra.mxu0 0.0
  %979 = vmatprep.subr.mxu0 0.0
  %980 = vmatpush1.msra.mxu0 0.0
  %981 = vmatprep.subr.mxu0 0.0
  %982 = vmatpush1.msra.mxu0 0.0
  %983 = vmatprep.subr.mxu0 0.0
  %984 = vmatpush1.msra.mxu0 0.0
  %985 = vmatprep.subr.mxu0 0.0
  %986 = vmatpush1.msra.mxu0 0.0
  %987 = vmatprep.subr.mxu0 0.0
  %988 = vmatpush1.msra.mxu0 0.0
  %989 = vmatprep.subr.mxu0 0.0
  %990 = vmatpush1.msra.mxu0 0.0
  %991 = vmatprep.subr.mxu0 0.0
  %992 = vmatpush1.msra.mxu0 0.0
  %993 = vmatprep.subr.mxu0 0.0
  %994 = vmatpush1.msra.mxu0 0.0
  %995 = vmatprep.subr.mxu0 0.0
  %996 = vmatpush1.msra.mxu0 0.0
  %997 = vmatprep.subr.mxu0 0.0
  %998 = vmatpush1.msra.mxu0 0.0
  %999 = vmatprep.subr.mxu0 %v965
  %1000 = vmatpush1.msra.mxu0 %v964
  %1001 = vmatprep.subr.mxu0 0.0
  %1002 = vmatpush2.msra.mxu0 0.0
  %1003 = vmatprep.subr.mxu0 0.0
  %1004 = vmatpush2.msra.mxu0 0.0
  %1005 = vmatprep.subr.mxu0 0.0
  %1006 = vmatpush2.msra.mxu0 0.0
  %1007 = vmatprep.subr.mxu0 0.0
  %1008 = vmatpush2.msra.mxu0 0.0
  %1009 = vmatprep.subr.mxu0 0.0
  %1010 = vmatpush2.msra.mxu0 0.0
  %1011 = vmatprep.subr.mxu0 0.0
  %1012 = vmatpush2.msra.mxu0 0.0
  %1013 = vmatprep.subr.mxu0 0.0
  %1014 = vmatpush2.msra.mxu0 0.0
  %1015 = vmatprep.subr.mxu0 0.0
  %1016 = vmatpush2.msra.mxu0 0.0
  %1017 = vmatprep.subr.mxu0 0.0
  %1018 = vmatpush2.msra.mxu0 0.0
  %1019 = vmatprep.subr.mxu0 0.0
  %1020 = vmatpush2.msra.mxu0 0.0
  %1021 = vmatprep.subr.mxu0 0.0
  %1022 = vmatpush2.msra.mxu0 0.0
  %1023 = vmatprep.subr.mxu0 0.0
  %1024 = vmatpush2.msra.mxu0 0.0
  %1025 = vmatprep.subr.mxu0 0.0
  %1026 = vmatpush2.msra.mxu0 0.0
  %1027 = vmatprep.subr.mxu0 0.0
  %1028 = vmatpush2.msra.mxu0 0.0
  %1029 = vmatprep.subr.mxu0 0.0
  %1030 = vmatpush2.msra.mxu0 0.0
  %1031 = vmatprep.subr.mxu0 0.0
  %1032 = vmatpush2.msra.mxu0 0.0
  %1033 = vmatprep.mubr.f32.mxu0 0.0
  %1034 = vmatmul.mubr.f32.gmra.mxu0 %v967
  %v1035 = vpop.f32.mrf.mxu0
  %v1036 = vadd.f32 0.0, %v1035
  %v1037 = vpop.f32.mrf.mxu0
  %v1038 = vadd.f32 0.0, %v1037
  %1039 = vdwg.mxu0
  %v1040 = vadd.f32 %v954, %v1036
  %v1041 = vadd.f32 %v956, %v1038
  %1042 = vrot.lane.b32.xlu0 %v867, 16
  %v1043 = vpop.permute.xlu0 %1042
  %1044 = vrot.lane.b32.xlu0 %v868, 16
  %v1045 = vpop.permute.xlu0 %1044
  %v1046 = vsel %vm276, %v1043, %v1045
  %v1047 = vsel %vm276, %v1045, %v1043
  %v1048 = vsel %vm65, %v1047, 0.0
  %v1049 = vsel %vm66, %v1046, 0.0
  %v1051 = vsel %vm112, %v870, 0
  %1053 = vmatprep.subr.mxu0 0.0
  %1054 = vmatpush1.msra.mxu0 0.0
  %1055 = vmatprep.subr.mxu0 0.0
  %1056 = vmatpush1.msra.mxu0 0.0
  %1057 = vmatprep.subr.mxu0 0.0
  %1058 = vmatpush1.msra.mxu0 0.0
  %1059 = vmatprep.subr.mxu0 0.0
  %1060 = vmatpush1.msra.mxu0 0.0
  %1061 = vmatprep.subr.mxu0 0.0
  %1062 = vmatpush1.msra.mxu0 0.0
  %1063 = vmatprep.subr.mxu0 0.0
  %1064 = vmatpush1.msra.mxu0 0.0
  %1065 = vmatprep.subr.mxu0 0.0
  %1066 = vmatpush1.msra.mxu0 0.0
  %1067 = vmatprep.subr.mxu0 0.0
  %1068 = vmatpush1.msra.mxu0 0.0
  %1069 = vmatprep.subr.mxu0 0.0
  %1070 = vmatpush1.msra.mxu0 0.0
  %1071 = vmatprep.subr.mxu0 0.0
  %1072 = vmatpush1.msra.mxu0 0.0
  %1073 = vmatprep.subr.mxu0 0.0
  %1074 = vmatpush1.msra.mxu0 0.0
  %1075 = vmatprep.subr.mxu0 0.0
  %1076 = vmatpush1.msra.mxu0 0.0
  %1077 = vmatprep.subr.mxu0 0.0
  %1078 = vmatpush1.msra.mxu0 0.0
  %1079 = vmatprep.subr.mxu0 0.0
  %1080 = vmatpush1.msra.mxu0 0.0
  %1081 = vmatprep.subr.mxu0 0.0
  %1082 = vmatpush1.msra.mxu0 0.0
  %1083 = vmatprep.subr.mxu0 %v1049
  %1084 = vmatpush1.msra.mxu0 %v1048
  %1085 = vmatprep.subr.mxu0 0.0
  %1086 = vmatpush2.msra.mxu0 0.0
  %1087 = vmatprep.subr.mxu0 0.0
  %1088 = vmatpush2.msra.mxu0 0.0
  %1089 = vmatprep.subr.mxu0 0.0
  %1090 = vmatpush2.msra.mxu0 0.0
  %1091 = vmatprep.subr.mxu0 0.0
  %1092 = vmatpush2.msra.mxu0 0.0
  %1093 = vmatprep.subr.mxu0 0.0
  %1094 = vmatpush2.msra.mxu0 0.0
  %1095 = vmatprep.subr.mxu0 0.0
  %1096 = vmatpush2.msra.mxu0 0.0
  %1097 = vmatprep.subr.mxu0 0.0
  %1098 = vmatpush2.msra.mxu0 0.0
  %1099 = vmatprep.subr.mxu0 0.0
  %1100 = vmatpush2.msra.mxu0 0.0
  %1101 = vmatprep.subr.mxu0 0.0
  %1102 = vmatpush2.msra.mxu0 0.0
  %1103 = vmatprep.subr.mxu0 0.0
  %1104 = vmatpush2.msra.mxu0 0.0
  %1105 = vmatprep.subr.mxu0 0.0
  %1106 = vmatpush2.msra.mxu0 0.0
  %1107 = vmatprep.subr.mxu0 0.0
  %1108 = vmatpush2.msra.mxu0 0.0
  %1109 = vmatprep.subr.mxu0 0.0
  %1110 = vmatpush2.msra.mxu0 0.0
  %1111 = vmatprep.subr.mxu0 0.0
  %1112 = vmatpush2.msra.mxu0 0.0
  %1113 = vmatprep.subr.mxu0 0.0
  %1114 = vmatpush2.msra.mxu0 0.0
  %1115 = vmatprep.subr.mxu0 0.0
  %1116 = vmatpush2.msra.mxu0 0.0
  %1117 = vmatprep.mubr.f32.mxu0 0.0
  %1118 = vmatmul.mubr.f32.gmra.mxu0 %v1051
  %v1119 = vpop.f32.mrf.mxu0
  %v1120 = vadd.f32 0.0, %v1119
  %v1121 = vpop.f32.mrf.mxu0
  %v1122 = vadd.f32 0.0, %v1121
  %1123 = vdwg.mxu0
  %v1124 = vadd.f32 %v1040, %v1120
  %v1125 = vadd.f32 %v1041, %v1122
  %1126 = vrot.lane.b32.xlu0 %v867, 15
  %v1127 = vpop.permute.xlu0 %1126
  %1128 = vrot.lane.b32.xlu0 %v868, 15
  %v1129 = vpop.permute.xlu0 %1128
  %v1130 = vsel %vm361, %v1127, %v1129
  %v1131 = vsel %vm361, %v1129, %v1127
  %v1132 = vsel %vm71, %v1131, 0.0
  %v1133 = vsel %vm72, %v1130, 0.0
  %v1135 = vsel %vm112, %v871, 0
  %1137 = vmatprep.subr.mxu0 0.0
  %1138 = vmatpush1.msra.mxu0 0.0
  %1139 = vmatprep.subr.mxu0 0.0
  %1140 = vmatpush1.msra.mxu0 0.0
  %1141 = vmatprep.subr.mxu0 0.0
  %1142 = vmatpush1.msra.mxu0 0.0
  %1143 = vmatprep.subr.mxu0 0.0
  %1144 = vmatpush1.msra.mxu0 0.0
  %1145 = vmatprep.subr.mxu0 0.0
  %1146 = vmatpush1.msra.mxu0 0.0
  %1147 = vmatprep.subr.mxu0 0.0
  %1148 = vmatpush1.msra.mxu0 0.0
  %1149 = vmatprep.subr.mxu0 0.0
  %1150 = vmatpush1.msra.mxu0 0.0
  %1151 = vmatprep.subr.mxu0 0.0
  %1152 = vmatpush1.msra.mxu0 0.0
  %1153 = vmatprep.subr.mxu0 0.0
  %1154 = vmatpush1.msra.mxu0 0.0
  %1155 = vmatprep.subr.mxu0 0.0
  %1156 = vmatpush1.msra.mxu0 0.0
  %1157 = vmatprep.subr.mxu0 0.0
  %1158 = vmatpush1.msra.mxu0 0.0
  %1159 = vmatprep.subr.mxu0 0.0
  %1160 = vmatpush1.msra.mxu0 0.0
  %1161 = vmatprep.subr.mxu0 0.0
  %1162 = vmatpush1.msra.mxu0 0.0
  %1163 = vmatprep.subr.mxu0 0.0
  %1164 = vmatpush1.msra.mxu0 0.0
  %1165 = vmatprep.subr.mxu0 0.0
  %1166 = vmatpush1.msra.mxu0 0.0
  %1167 = vmatprep.subr.mxu0 %v1133
  %1168 = vmatpush1.msra.mxu0 %v1132
  %1169 = vmatprep.subr.mxu0 0.0
  %1170 = vmatpush2.msra.mxu0 0.0
  %1171 = vmatprep.subr.mxu0 0.0
  %1172 = vmatpush2.msra.mxu0 0.0
  %1173 = vmatprep.subr.mxu0 0.0
  %1174 = vmatpush2.msra.mxu0 0.0
  %1175 = vmatprep.subr.mxu0 0.0
  %1176 = vmatpush2.msra.mxu0 0.0
  %1177 = vmatprep.subr.mxu0 0.0
  %1178 = vmatpush2.msra.mxu0 0.0
  %1179 = vmatprep.subr.mxu0 0.0
  %1180 = vmatpush2.msra.mxu0 0.0
  %1181 = vmatprep.subr.mxu0 0.0
  %1182 = vmatpush2.msra.mxu0 0.0
  %1183 = vmatprep.subr.mxu0 0.0
  %1184 = vmatpush2.msra.mxu0 0.0
  %1185 = vmatprep.subr.mxu0 0.0
  %1186 = vmatpush2.msra.mxu0 0.0
  %1187 = vmatprep.subr.mxu0 0.0
  %1188 = vmatpush2.msra.mxu0 0.0
  %1189 = vmatprep.subr.mxu0 0.0
  %1190 = vmatpush2.msra.mxu0 0.0
  %1191 = vmatprep.subr.mxu0 0.0
  %1192 = vmatpush2.msra.mxu0 0.0
  %1193 = vmatprep.subr.mxu0 0.0
  %1194 = vmatpush2.msra.mxu0 0.0
  %1195 = vmatprep.subr.mxu0 0.0
  %1196 = vmatpush2.msra.mxu0 0.0
  %1197 = vmatprep.subr.mxu0 0.0
  %1198 = vmatpush2.msra.mxu0 0.0
  %1199 = vmatprep.subr.mxu0 0.0
  %1200 = vmatpush2.msra.mxu0 0.0
  %1201 = vmatprep.mubr.f32.mxu0 0.0
  %1202 = vmatmul.mubr.f32.gmra.mxu0 %v1135
  %v1203 = vpop.f32.mrf.mxu0
  %v1204 = vadd.f32 0.0, %v1203
  %v1205 = vpop.f32.mrf.mxu0
  %v1206 = vadd.f32 0.0, %v1205
  %1207 = vdwg.mxu0
  %v1208 = vadd.f32 %v1124, %v1204
  %v1209 = vadd.f32 %v1125, %v1206
  %1210 = vrot.lane.b32.xlu0 %v867, 1
  %v1211 = vpop.permute.xlu0 %1210
  %1212 = vrot.lane.b32.xlu0 %v868, 1
  %v1213 = vpop.permute.xlu0 %1212
  %v1214 = vsel %vm446, %v1211, %v1213
  %v1215 = vsel %vm446, %v1213, %v1211
  %v1216 = vsel %vm75, %v1215, 0.0
  %v1217 = vsel %vm76, %v1214, 0.0
  %v1219 = vsel %vm112, %v872, 0
  %1221 = vmatprep.subr.mxu0 0.0
  %1222 = vmatpush1.msra.mxu0 0.0
  %1223 = vmatprep.subr.mxu0 0.0
  %1224 = vmatpush1.msra.mxu0 0.0
  %1225 = vmatprep.subr.mxu0 0.0
  %1226 = vmatpush1.msra.mxu0 0.0
  %1227 = vmatprep.subr.mxu0 0.0
  %1228 = vmatpush1.msra.mxu0 0.0
  %1229 = vmatprep.subr.mxu0 0.0
  %1230 = vmatpush1.msra.mxu0 0.0
  %1231 = vmatprep.subr.mxu0 0.0
  %1232 = vmatpush1.msra.mxu0 0.0
  %1233 = vmatprep.subr.mxu0 0.0
  %1234 = vmatpush1.msra.mxu0 0.0
  %1235 = vmatprep.subr.mxu0 0.0
  %1236 = vmatpush1.msra.mxu0 0.0
  %1237 = vmatprep.subr.mxu0 0.0
  %1238 = vmatpush1.msra.mxu0 0.0
  %1239 = vmatprep.subr.mxu0 0.0
  %1240 = vmatpush1.msra.mxu0 0.0
  %1241 = vmatprep.subr.mxu0 0.0
  %1242 = vmatpush1.msra.mxu0 0.0
  %1243 = vmatprep.subr.mxu0 0.0
  %1244 = vmatpush1.msra.mxu0 0.0
  %1245 = vmatprep.subr.mxu0 0.0
  %1246 = vmatpush1.msra.mxu0 0.0
  %1247 = vmatprep.subr.mxu0 0.0
  %1248 = vmatpush1.msra.mxu0 0.0
  %1249 = vmatprep.subr.mxu0 0.0
  %1250 = vmatpush1.msra.mxu0 0.0
  %1251 = vmatprep.subr.mxu0 %v1217
  %1252 = vmatpush1.msra.mxu0 %v1216
  %1253 = vmatprep.subr.mxu0 0.0
  %1254 = vmatpush2.msra.mxu0 0.0
  %1255 = vmatprep.subr.mxu0 0.0
  %1256 = vmatpush2.msra.mxu0 0.0
  %1257 = vmatprep.subr.mxu0 0.0
  %1258 = vmatpush2.msra.mxu0 0.0
  %1259 = vmatprep.subr.mxu0 0.0
  %1260 = vmatpush2.msra.mxu0 0.0
  %1261 = vmatprep.subr.mxu0 0.0
  %1262 = vmatpush2.msra.mxu0 0.0
  %1263 = vmatprep.subr.mxu0 0.0
  %1264 = vmatpush2.msra.mxu0 0.0
  %1265 = vmatprep.subr.mxu0 0.0
  %1266 = vmatpush2.msra.mxu0 0.0
  %1267 = vmatprep.subr.mxu0 0.0
  %1268 = vmatpush2.msra.mxu0 0.0
  %1269 = vmatprep.subr.mxu0 0.0
  %1270 = vmatpush2.msra.mxu0 0.0
  %1271 = vmatprep.subr.mxu0 0.0
  %1272 = vmatpush2.msra.mxu0 0.0
  %1273 = vmatprep.subr.mxu0 0.0
  %1274 = vmatpush2.msra.mxu0 0.0
  %1275 = vmatprep.subr.mxu0 0.0
  %1276 = vmatpush2.msra.mxu0 0.0
  %1277 = vmatprep.subr.mxu0 0.0
  %1278 = vmatpush2.msra.mxu0 0.0
  %1279 = vmatprep.subr.mxu0 0.0
  %1280 = vmatpush2.msra.mxu0 0.0
  %1281 = vmatprep.subr.mxu0 0.0
  %1282 = vmatpush2.msra.mxu0 0.0
  %1283 = vmatprep.subr.mxu0 0.0
  %1284 = vmatpush2.msra.mxu0 0.0
  %1285 = vmatprep.mubr.f32.mxu0 0.0
  %1286 = vmatmul.mubr.f32.gmra.mxu0 %v1219
  %v1287 = vpop.f32.mrf.mxu0
  %v1288 = vadd.f32 0.0, %v1287
  %v1289 = vpop.f32.mrf.mxu0
  %v1290 = vadd.f32 0.0, %v1289
  %1291 = vdwg.mxu0
  %v1292 = vadd.f32 %v1208, %v1288
  %v1293 = vadd.f32 %v1209, %v1290
  %1294 = vrot.lane.b32.xlu0 %v867, 127
  %v1295 = vpop.permute.xlu0 %1294
  %1296 = vrot.lane.b32.xlu0 %v868, 127
  %v1297 = vpop.permute.xlu0 %1296
  %v1298 = vsel %vm531, %v1295, %v1297
  %v1299 = vsel %vm531, %v1297, %v1295
  %v1300 = vsel %vm79, %v1298, 0.0
  %v1301 = vsel %vm80, %v1299, 0.0
  %v1303 = vsel %vm112, %v874, 0
  %1305 = vmatprep.subr.mxu0 0.0
  %1306 = vmatpush1.msra.mxu0 0.0
  %1307 = vmatprep.subr.mxu0 0.0
  %1308 = vmatpush1.msra.mxu0 0.0
  %1309 = vmatprep.subr.mxu0 0.0
  %1310 = vmatpush1.msra.mxu0 0.0
  %1311 = vmatprep.subr.mxu0 0.0
  %1312 = vmatpush1.msra.mxu0 0.0
  %1313 = vmatprep.subr.mxu0 0.0
  %1314 = vmatpush1.msra.mxu0 0.0
  %1315 = vmatprep.subr.mxu0 0.0
  %1316 = vmatpush1.msra.mxu0 0.0
  %1317 = vmatprep.subr.mxu0 0.0
  %1318 = vmatpush1.msra.mxu0 0.0
  %1319 = vmatprep.subr.mxu0 0.0
  %1320 = vmatpush1.msra.mxu0 0.0
  %1321 = vmatprep.subr.mxu0 0.0
  %1322 = vmatpush1.msra.mxu0 0.0
  %1323 = vmatprep.subr.mxu0 0.0
  %1324 = vmatpush1.msra.mxu0 0.0
  %1325 = vmatprep.subr.mxu0 0.0
  %1326 = vmatpush1.msra.mxu0 0.0
  %1327 = vmatprep.subr.mxu0 0.0
  %1328 = vmatpush1.msra.mxu0 0.0
  %1329 = vmatprep.subr.mxu0 0.0
  %1330 = vmatpush1.msra.mxu0 0.0
  %1331 = vmatprep.subr.mxu0 0.0
  %1332 = vmatpush1.msra.mxu0 0.0
  %1333 = vmatprep.subr.mxu0 0.0
  %1334 = vmatpush1.msra.mxu0 0.0
  %1335 = vmatprep.subr.mxu0 %v1301
  %1336 = vmatpush1.msra.mxu0 %v1300
  %1337 = vmatprep.subr.mxu0 0.0
  %1338 = vmatpush2.msra.mxu0 0.0
  %1339 = vmatprep.subr.mxu0 0.0
  %1340 = vmatpush2.msra.mxu0 0.0
  %1341 = vmatprep.subr.mxu0 0.0
  %1342 = vmatpush2.msra.mxu0 0.0
  %1343 = vmatprep.subr.mxu0 0.0
  %1344 = vmatpush2.msra.mxu0 0.0
  %1345 = vmatprep.subr.mxu0 0.0
  %1346 = vmatpush2.msra.mxu0 0.0
  %1347 = vmatprep.subr.mxu0 0.0
  %1348 = vmatpush2.msra.mxu0 0.0
  %1349 = vmatprep.subr.mxu0 0.0
  %1350 = vmatpush2.msra.mxu0 0.0
  %1351 = vmatprep.subr.mxu0 0.0
  %1352 = vmatpush2.msra.mxu0 0.0
  %1353 = vmatprep.subr.mxu0 0.0
  %1354 = vmatpush2.msra.mxu0 0.0
  %1355 = vmatprep.subr.mxu0 0.0
  %1356 = vmatpush2.msra.mxu0 0.0
  %1357 = vmatprep.subr.mxu0 0.0
  %1358 = vmatpush2.msra.mxu0 0.0
  %1359 = vmatprep.subr.mxu0 0.0
  %1360 = vmatpush2.msra.mxu0 0.0
  %1361 = vmatprep.subr.mxu0 0.0
  %1362 = vmatpush2.msra.mxu0 0.0
  %1363 = vmatprep.subr.mxu0 0.0
  %1364 = vmatpush2.msra.mxu0 0.0
  %1365 = vmatprep.subr.mxu0 0.0
  %1366 = vmatpush2.msra.mxu0 0.0
  %1367 = vmatprep.subr.mxu0 0.0
  %1368 = vmatpush2.msra.mxu0 0.0
  %1369 = vmatprep.mubr.f32.mxu0 0.0
  %1370 = vmatmul.mubr.f32.gmra.mxu0 %v1303
  %v1371 = vpop.f32.mrf.mxu0
  %v1372 = vadd.f32 0.0, %v1371
  %v1373 = vpop.f32.mrf.mxu0
  %v1374 = vadd.f32 0.0, %v1373
  %1375 = vdwg.mxu0
  %v1376 = vadd.f32 %v1292, %v1372
  %v1377 = vadd.f32 %v1293, %v1374
  %1378 = vrot.lane.b32.xlu0 %v867, 113
  %v1379 = vpop.permute.xlu0 %1378
  %1380 = vrot.lane.b32.xlu0 %v868, 113
  %v1381 = vpop.permute.xlu0 %1380
  %v1382 = vsel %vm616, %v1379, %v1381
  %v1383 = vsel %vm616, %v1381, %v1379
  %v1384 = vsel %vm85, %v1382, 0.0
  %v1385 = vsel %vm86, %v1383, 0.0
  %v1387 = vsel %vm112, %v875, 0
  %1389 = vmatprep.subr.mxu0 0.0
  %1390 = vmatpush1.msra.mxu0 0.0
  %1391 = vmatprep.subr.mxu0 0.0
  %1392 = vmatpush1.msra.mxu0 0.0
  %1393 = vmatprep.subr.mxu0 0.0
  %1394 = vmatpush1.msra.mxu0 0.0
  %1395 = vmatprep.subr.mxu0 0.0
  %1396 = vmatpush1.msra.mxu0 0.0
  %1397 = vmatprep.subr.mxu0 0.0
  %1398 = vmatpush1.msra.mxu0 0.0
  %1399 = vmatprep.subr.mxu0 0.0
  %1400 = vmatpush1.msra.mxu0 0.0
  %1401 = vmatprep.subr.mxu0 0.0
  %1402 = vmatpush1.msra.mxu0 0.0
  %1403 = vmatprep.subr.mxu0 0.0
  %1404 = vmatpush1.msra.mxu0 0.0
  %1405 = vmatprep.subr.mxu0 0.0
  %1406 = vmatpush1.msra.mxu0 0.0
  %1407 = vmatprep.subr.mxu0 0.0
  %1408 = vmatpush1.msra.mxu0 0.0
  %1409 = vmatprep.subr.mxu0 0.0
  %1410 = vmatpush1.msra.mxu0 0.0
  %1411 = vmatprep.subr.mxu0 0.0
  %1412 = vmatpush1.msra.mxu0 0.0
  %1413 = vmatprep.subr.mxu0 0.0
  %1414 = vmatpush1.msra.mxu0 0.0
  %1415 = vmatprep.subr.mxu0 0.0
  %1416 = vmatpush1.msra.mxu0 0.0
  %1417 = vmatprep.subr.mxu0 0.0
  %1418 = vmatpush1.msra.mxu0 0.0
  %1419 = vmatprep.subr.mxu0 %v1385
  %1420 = vmatpush1.msra.mxu0 %v1384
  %1421 = vmatprep.subr.mxu0 0.0
  %1422 = vmatpush2.msra.mxu0 0.0
  %1423 = vmatprep.subr.mxu0 0.0
  %1424 = vmatpush2.msra.mxu0 0.0
  %1425 = vmatprep.subr.mxu0 0.0
  %1426 = vmatpush2.msra.mxu0 0.0
  %1427 = vmatprep.subr.mxu0 0.0
  %1428 = vmatpush2.msra.mxu0 0.0
  %1429 = vmatprep.subr.mxu0 0.0
  %1430 = vmatpush2.msra.mxu0 0.0
  %1431 = vmatprep.subr.mxu0 0.0
  %1432 = vmatpush2.msra.mxu0 0.0
  %1433 = vmatprep.subr.mxu0 0.0
  %1434 = vmatpush2.msra.mxu0 0.0
  %1435 = vmatprep.subr.mxu0 0.0
  %1436 = vmatpush2.msra.mxu0 0.0
  %1437 = vmatprep.subr.mxu0 0.0
  %1438 = vmatpush2.msra.mxu0 0.0
  %1439 = vmatprep.subr.mxu0 0.0
  %1440 = vmatpush2.msra.mxu0 0.0
  %1441 = vmatprep.subr.mxu0 0.0
  %1442 = vmatpush2.msra.mxu0 0.0
  %1443 = vmatprep.subr.mxu0 0.0
  %1444 = vmatpush2.msra.mxu0 0.0
  %1445 = vmatprep.subr.mxu0 0.0
  %1446 = vmatpush2.msra.mxu0 0.0
  %1447 = vmatprep.subr.mxu0 0.0
  %1448 = vmatpush2.msra.mxu0 0.0
  %1449 = vmatprep.subr.mxu0 0.0
  %1450 = vmatpush2.msra.mxu0 0.0
  %1451 = vmatprep.subr.mxu0 0.0
  %1452 = vmatpush2.msra.mxu0 0.0
  %1453 = vmatprep.mubr.f32.mxu0 0.0
  %1454 = vmatmul.mubr.f32.gmra.mxu0 %v1387
  %v1455 = vpop.f32.mrf.mxu0
  %v1456 = vadd.f32 0.0, %v1455
  %v1457 = vpop.f32.mrf.mxu0
  %v1458 = vadd.f32 0.0, %v1457
  %1459 = vdwg.mxu0
  %v1460 = vadd.f32 %v1376, %v1456
  %v1461 = vadd.f32 %v1377, %v1458
  %1462 = vrot.lane.b32.xlu0 %v867, 112
  %v1463 = vpop.permute.xlu0 %1462
  %1464 = vrot.lane.b32.xlu0 %v868, 112
  %v1465 = vpop.permute.xlu0 %1464
  %v1466 = vsel %vm701, %v1463, %v1465
  %v1467 = vsel %vm701, %v1465, %v1463
  %v1468 = vsel %vm89, %v1466, 0.0
  %v1469 = vsel %vm90, %v1467, 0.0
  %v1471 = vsel %vm112, %v876, 0
  %1473 = vmatprep.subr.mxu0 0.0
  %1474 = vmatpush1.msra.mxu0 0.0
  %1475 = vmatprep.subr.mxu0 0.0
  %1476 = vmatpush1.msra.mxu0 0.0
  %1477 = vmatprep.subr.mxu0 0.0
  %1478 = vmatpush1.msra.mxu0 0.0
  %1479 = vmatprep.subr.mxu0 0.0
  %1480 = vmatpush1.msra.mxu0 0.0
  %1481 = vmatprep.subr.mxu0 0.0
  %1482 = vmatpush1.msra.mxu0 0.0
  %1483 = vmatprep.subr.mxu0 0.0
  %1484 = vmatpush1.msra.mxu0 0.0
  %1485 = vmatprep.subr.mxu0 0.0
  %1486 = vmatpush1.msra.mxu0 0.0
  %1487 = vmatprep.subr.mxu0 0.0
  %1488 = vmatpush1.msra.mxu0 0.0
  %1489 = vmatprep.subr.mxu0 0.0
  %1490 = vmatpush1.msra.mxu0 0.0
  %1491 = vmatprep.subr.mxu0 0.0
  %1492 = vmatpush1.msra.mxu0 0.0
  %1493 = vmatprep.subr.mxu0 0.0
  %1494 = vmatpush1.msra.mxu0 0.0
  %1495 = vmatprep.subr.mxu0 0.0
  %1496 = vmatpush1.msra.mxu0 0.0
  %1497 = vmatprep.subr.mxu0 0.0
  %1498 = vmatpush1.msra.mxu0 0.0
  %1499 = vmatprep.subr.mxu0 0.0
  %1500 = vmatpush1.msra.mxu0 0.0
  %1501 = vmatprep.subr.mxu0 0.0
  %1502 = vmatpush1.msra.mxu0 0.0
  %1503 = vmatprep.subr.mxu0 %v1469
  %1504 = vmatpush1.msra.mxu0 %v1468
  %1505 = vmatprep.subr.mxu0 0.0
  %1506 = vmatpush2.msra.mxu0 0.0
  %1507 = vmatprep.subr.mxu0 0.0
  %1508 = vmatpush2.msra.mxu0 0.0
  %1509 = vmatprep.subr.mxu0 0.0
  %1510 = vmatpush2.msra.mxu0 0.0
  %1511 = vmatprep.subr.mxu0 0.0
  %1512 = vmatpush2.msra.mxu0 0.0
  %1513 = vmatprep.subr.mxu0 0.0
  %1514 = vmatpush2.msra.mxu0 0.0
  %1515 = vmatprep.subr.mxu0 0.0
  %1516 = vmatpush2.msra.mxu0 0.0
  %1517 = vmatprep.subr.mxu0 0.0
  %1518 = vmatpush2.msra.mxu0 0.0
  %1519 = vmatprep.subr.mxu0 0.0
  %1520 = vmatpush2.msra.mxu0 0.0
  %1521 = vmatprep.subr.mxu0 0.0
  %1522 = vmatpush2.msra.mxu0 0.0
  %1523 = vmatprep.subr.mxu0 0.0
  %1524 = vmatpush2.msra.mxu0 0.0
  %1525 = vmatprep.subr.mxu0 0.0
  %1526 = vmatpush2.msra.mxu0 0.0
  %1527 = vmatprep.subr.mxu0 0.0
  %1528 = vmatpush2.msra.mxu0 0.0
  %1529 = vmatprep.subr.mxu0 0.0
  %1530 = vmatpush2.msra.mxu0 0.0
  %1531 = vmatprep.subr.mxu0 0.0
  %1532 = vmatpush2.msra.mxu0 0.0
  %1533 = vmatprep.subr.mxu0 0.0
  %1534 = vmatpush2.msra.mxu0 0.0
  %1535 = vmatprep.subr.mxu0 0.0
  %1536 = vmatpush2.msra.mxu0 0.0
  %1537 = vmatprep.mubr.f32.mxu0 0.0
  %1538 = vmatmul.mubr.f32.gmra.mxu0 %v1471
  %v1539 = vpop.f32.mrf.mxu0
  %v1540 = vadd.f32 0.0, %v1539
  %v1541 = vpop.f32.mrf.mxu0
  %v1542 = vadd.f32 0.0, %v1541
  %1543 = vdwg.mxu0
  %v1544 = vadd.f32 %v1460, %v1540
  %v1545 = vadd.f32 %v1461, %v1542
  %1546 = vrot.lane.b32.xlu0 %v867, 111
  %v1547 = vpop.permute.xlu0 %1546
  %1548 = vrot.lane.b32.xlu0 %v868, 111
  %v1549 = vpop.permute.xlu0 %1548
  %v1550 = vsel %vm786, %v1547, %v1549
  %v1551 = vsel %vm786, %v1549, %v1547
  %v1552 = vsel %vm95, %v1550, 0.0
  %v1553 = vsel %vm96, %v1551, 0.0
  %v1555 = vsel %vm112, %v877, 0
  %1557 = vmatprep.subr.mxu0 0.0
  %1558 = vmatpush1.msra.mxu0 0.0
  %1559 = vmatprep.subr.mxu0 0.0
  %1560 = vmatpush1.msra.mxu0 0.0
  %1561 = vmatprep.subr.mxu0 0.0
  %1562 = vmatpush1.msra.mxu0 0.0
  %1563 = vmatprep.subr.mxu0 0.0
  %1564 = vmatpush1.msra.mxu0 0.0
  %1565 = vmatprep.subr.mxu0 0.0
  %1566 = vmatpush1.msra.mxu0 0.0
  %1567 = vmatprep.subr.mxu0 0.0
  %1568 = vmatpush1.msra.mxu0 0.0
  %1569 = vmatprep.subr.mxu0 0.0
  %1570 = vmatpush1.msra.mxu0 0.0
  %1571 = vmatprep.subr.mxu0 0.0
  %1572 = vmatpush1.msra.mxu0 0.0
  %1573 = vmatprep.subr.mxu0 0.0
  %1574 = vmatpush1.msra.mxu0 0.0
  %1575 = vmatprep.subr.mxu0 0.0
  %1576 = vmatpush1.msra.mxu0 0.0
  %1577 = vmatprep.subr.mxu0 0.0
  %1578 = vmatpush1.msra.mxu0 0.0
  %1579 = vmatprep.subr.mxu0 0.0
  %1580 = vmatpush1.msra.mxu0 0.0
  %1581 = vmatprep.subr.mxu0 0.0
  %1582 = vmatpush1.msra.mxu0 0.0
  %1583 = vmatprep.subr.mxu0 0.0
  %1584 = vmatpush1.msra.mxu0 0.0
  %1585 = vmatprep.subr.mxu0 0.0
  %1586 = vmatpush1.msra.mxu0 0.0
  %1587 = vmatprep.subr.mxu0 %v1553
  %1588 = vmatpush1.msra.mxu0 %v1552
  %1589 = vmatprep.subr.mxu0 0.0
  %1590 = vmatpush2.msra.mxu0 0.0
  %1591 = vmatprep.subr.mxu0 0.0
  %1592 = vmatpush2.msra.mxu0 0.0
  %1593 = vmatprep.subr.mxu0 0.0
  %1594 = vmatpush2.msra.mxu0 0.0
  %1595 = vmatprep.subr.mxu0 0.0
  %1596 = vmatpush2.msra.mxu0 0.0
  %1597 = vmatprep.subr.mxu0 0.0
  %1598 = vmatpush2.msra.mxu0 0.0
  %1599 = vmatprep.subr.mxu0 0.0
  %1600 = vmatpush2.msra.mxu0 0.0
  %1601 = vmatprep.subr.mxu0 0.0
  %1602 = vmatpush2.msra.mxu0 0.0
  %1603 = vmatprep.subr.mxu0 0.0
  %1604 = vmatpush2.msra.mxu0 0.0
  %1605 = vmatprep.subr.mxu0 0.0
  %1606 = vmatpush2.msra.mxu0 0.0
  %1607 = vmatprep.subr.mxu0 0.0
  %1608 = vmatpush2.msra.mxu0 0.0
  %1609 = vmatprep.subr.mxu0 0.0
  %1610 = vmatpush2.msra.mxu0 0.0
  %1611 = vmatprep.subr.mxu0 0.0
  %1612 = vmatpush2.msra.mxu0 0.0
  %1613 = vmatprep.subr.mxu0 0.0
  %1614 = vmatpush2.msra.mxu0 0.0
  %1615 = vmatprep.subr.mxu0 0.0
  %1616 = vmatpush2.msra.mxu0 0.0
  %1617 = vmatprep.subr.mxu0 0.0
  %1618 = vmatpush2.msra.mxu0 0.0
  %1619 = vmatprep.subr.mxu0 0.0
  %1620 = vmatpush2.msra.mxu0 0.0
  %1621 = vmatprep.mubr.f32.mxu0 0.0
  %1622 = vmatmul.mubr.f32.gmra.mxu0 %v1555
  %v1623 = vpop.f32.mrf.mxu0
  %v1624 = vadd.f32 0.0, %v1623
  %v1625 = vpop.f32.mrf.mxu0
  %v1626 = vadd.f32 0.0, %v1625
  %1627 = vdwg.mxu0
  %v1628 = vadd.f32 %v1544, %v1624
  %v1629 = vadd.f32 %v1545, %v1626
  %v1630 = vadd.f32 %v1628, %v20
  %v1631 = vadd.f32 %v1629, %v21
  %1632 = vst [vmem:[%s5] sm:$0xff] %v1630
  %1633 = vst [vmem:[%s5 + $0x8] sm:$0xff] %v1631
  // Predicated region
  $region22: #{residual_block.1} parent=0 // pred_check
    _
  $region23: #{residual_block.1} parent=0 // pred_check_branch
    %1635 = sbr.rel (0) target = $region25
  $region24: #{residual_block.1} parent=0 // pred_region
    _
  $region25: #{residual_block.1} parent=0 // pred_fallthru
    _
  // Predicated region
  $region26: #{residual_block.1} parent=0 // pred_check
    _
  $region27: #{residual_block.1} parent=0 // pred_check_branch
    %1637 = sbr.rel (0) target = $region29
  $region28: #{residual_block.1} parent=0 // pred_region
    _
  $region29: #{residual_block.1} parent=0 // pred_fallthru
    _

</llo_original>
